<compile_context>
chip_gen: v6e
topology: v6e:2x2x1
jax: 0.10.0
libtpu: 0.0.40
codegen_flags: <defaults>
</compile_context>

<pallas_src>
import jax
import jax.numpy as jnp
from jax import lax
from jax.experimental import pallas as pl
from jax.experimental.pallas import tpu as pltpu

LN_EPS = 1e-5  # torch.nn.LayerNorm default


# ---------------------------------------------------------------------------
# Helpers
# ---------------------------------------------------------------------------
def _pad_to_lanes(c):
    """Round a feature dim up to a multiple of 128 (vreg lane width)."""
    return ((c + 127) // 128) * 128


def _round_up(v, m):
    return ((v + m - 1) // m) * m


def _chip_info():
    """Returns (num_tensorcores_per_chip, vmem_capacity_bytes, is_v7)."""
    kind = ""
    try:
        kind = jax.devices()[0].device_kind.lower()
    except Exception:
        pass
    is_v7 = "v7" in kind
    num_cores = 2 if is_v7 else 1
    vmem_cap = (64 if is_v7 else 128) * 1024 * 1024
    try:
        info = pltpu.get_tpu_info()
        vmem_cap = int(getattr(info, "vmem_capacity_bytes", vmem_cap))
    except Exception:
        pass
    return num_cores, vmem_cap, is_v7


def _row_tiling(n, num_cores, widest_padded, is_v7):
    """Pick (row_tile, padded_rows), generation-aware.

    v5e/v6e (1 TC): one big step when it fits (amortize ~0.35us/step).
    v7x (2 TC): always >= 2 "parallel" steps so both cores get work; drop the
    tile to 256 when the widest padded layer is >= 2048 lanes (VMEM pressure).
    """
    tile = 256 if (is_v7 and widest_padded >= 2048) else 512
    if num_cores <= 1:
        if n <= tile:
            tm = max(8, _round_up(n, 8))
            return tm, tm
        return tile, _round_up(n, tile)
    if n <= 2 * tile:
        tm = max(8, _round_up(-(-n // 2), 8))  # ceil(n/2) rounded to sublane
        return tm, 2 * tm
    return tile, _round_up(n, tile)


def _apply_activation(y, activation):
    if activation == "relu":
        return jnp.maximum(y, 0.0)
    if activation == "elu":
        return jnp.where(y > 0, y, jnp.exp(jnp.minimum(y, 0.0)) - 1.0)
    if activation == "tanh":
        return jnp.tanh(y)
    raise ValueError("Invalid activation")


# ---------------------------------------------------------------------------
# Fused kernel factory
# ---------------------------------------------------------------------------
def _make_mlp_kernel(num_hidden, use_ln, residual_flags, hidden_real, activation):
    """Kernel computing the full MLP on one row-tile kept in VMEM.

    Ref layout: (x, [per hidden layer: wT, b (+ gamma, beta if use_ln)],
                 final wT, final b, out)."""
    per_hidden = 4 if use_ln else 2

    def kernel(*refs):
        x_ref = refs[0]
        o_ref = refs[-1]
        p = refs[1:-1]

        x = x_ref[...].astype(jnp.float32)
        x_prev = x

        idx = 0
        for i in range(num_hidden):
            wT = p[idx][...]                       # stored in mxu dtype (bf16)
            b = p[idx + 1][...].astype(jnp.float32)
            y = jnp.dot(x.astype(wT.dtype), wT,
                        preferred_element_type=jnp.float32)
            y = y + b
            y = _apply_activation(y, activation)
            if use_ln:
                g = p[idx + 2][...].astype(jnp.float32)
                be = p[idx + 3][...].astype(jnp.float32)
                inv_h = 1.0 / float(hidden_real[i])  # real (unpadded) width
                # one-pass stats: padded lanes are exactly 0, so padded sums
                # equal the real-width sums. Clamp var >= 0 (cancellation).
                s1 = jnp.sum(y, axis=-1, keepdims=True)
                s2 = jnp.sum(y * y, axis=-1, keepdims=True)
                mean = s1 * inv_h
                var = jnp.maximum(s2 * inv_h - mean * mean, 0.0)
                y = (y - mean) * lax.rsqrt(var + LN_EPS)
                y = y * g + be  # padded gamma/beta are 0 -> pads stay 0
            if residual_flags[i]:
                y = y + x_prev
            # dropout(p=0.0) -> identity
            x = y
            x_prev = x
            idx += per_hidden

        wT = p[idx][...]
        b = p[idx + 1][...].astype(jnp.float32)
        y = jnp.dot(x.astype(wT.dtype), wT,
                    preferred_element_type=jnp.float32) + b
        if residual_flags[num_hidden]:
            y = y + x_prev
        o_ref[...] = y.astype(o_ref.dtype)

    return kernel


# ---------------------------------------------------------------------------
# Parameter packing (pad ONCE, reuse across calls)
# ---------------------------------------------------------------------------
def pack_mlp_params(lins, lns, *, use_ln=True, mxu_dtype=jnp.bfloat16):
    """Pads / casts parameters once. lins: list of (wT [in,out], b [1,out]);
    lns: list of (gamma [1,h], beta [1,h])."""
    num_hidden = len(lins) - 1
    cin = lins[0][0].shape[0]
    outs_real = [wT.shape[1] for wT, _ in lins]
    cin_p = _pad_to_lanes(cin)
    outs_p = [_pad_to_lanes(c) for c in outs_real]

    params, shapes = [], []
    prev_p = cin_p
    for li, (wT, b) in enumerate(lins):
        fan_in, fan_out = wT.shape
        co_p = outs_p[li]
        w_p = jnp.zeros((prev_p, co_p), mxu_dtype).at[:fan_in, :fan_out].set(
            wT.astype(mxu_dtype))
        b_p = jnp.zeros((1, co_p), jnp.float32).at[:, :fan_out].set(
            b.reshape(1, -1).astype(jnp.float32))
        params += [w_p, b_p]
        shapes += [(prev_p, co_p), (1, co_p)]
        if use_ln and li < num_hidden:
            g, be = lns[li]
            g_p = jnp.zeros((1, co_p), jnp.float32).at[:, :fan_out].set(
                g.reshape(1, -1).astype(jnp.float32))
            be_p = jnp.zeros((1, co_p), jnp.float32).at[:, :fan_out].set(
                be.reshape(1, -1).astype(jnp.float32))
            params += [g_p, be_p]
            shapes += [(1, co_p), (1, co_p)]
        prev_p = co_p

    return dict(params=params, shapes=shapes, cin=cin, cin_p=cin_p,
                outs_real=outs_real, outs_p=outs_p, use_ln=use_ln,
                num_hidden=num_hidden, mxu_dtype=mxu_dtype)


# ---------------------------------------------------------------------------
# Wrapper: pad rows if needed, build specs, single pallas_call
# ---------------------------------------------------------------------------
def mlp_forward(x, lins=None, lns=None, *, packed=None, use_ln=True,
                residual=False, activation="relu", mxu_dtype=jnp.bfloat16):
    """Pallas-backed MLP forward.  Pass `packed=pack_mlp_params(...)` on hot
    paths so weights are padded/cast once instead of per call."""
    if packed is None:
        packed = pack_mlp_params(lins, lns, use_ln=use_ln, mxu_dtype=mxu_dtype)
    use_ln = packed["use_ln"]
    num_hidden = packed["num_hidden"]
    cin, cin_p = packed["cin"], packed["cin_p"]
    outs_real, outs_p = packed["outs_real"], packed["outs_p"]
    cout_p = outs_p[-1]
    params, shapes = packed["params"], packed["shapes"]

    n, cin_x = x.shape
    assert cin_x == cin, (cin_x, cin)

    # residual flags from REAL shapes (mirrors PyTorch x_prev.shape == x.shape)
    res_flags = []
    prev = cin
    for co in outs_real:
        res_flags.append(bool(residual) and prev == co)
        prev = co

    num_cores, vmem_cap, is_v7 = _chip_info()
    widest = max([cin_p] + outs_p)
    tm, n_pad = _row_tiling(n, num_cores, widest, is_v7)

    # only pad x when its shape actually requires it
    if n_pad == n and cin_p == cin:
        x_p = x
    else:
        x_p = jnp.pad(x, ((0, n_pad - n), (0, cin_p - cin)))

    kernel = _make_mlp_kernel(
        num_hidden=num_hidden, use_ln=use_ln,
        residual_flags=tuple(res_flags),
        hidden_real=tuple(outs_real[:-1]),
        activation=activation)

    # ---- VMEM budget (params single-buffered, x/out double-buffered) -------
    out_itemsize = jnp.dtype(x.dtype).itemsize
    param_bytes = sum(int(p.size) * p.dtype.itemsize for p in params)
    x_tile_bytes = 2 * tm * cin_p * x.dtype.itemsize
    out_tile_bytes = 2 * tm * cout_p * out_itemsize
    interm_bytes = 4 * tm * widest * 4  # x, x_prev, y (f32) + bf16 dot operand
    need = param_bytes + x_tile_bytes + out_tile_bytes + interm_bytes + (2 << 20)
    cap = int(0.85 * vmem_cap)
    vmem_limit = int(min(cap, max(need, 32 << 20)))
    # TODO(synk): need > cap means weights can't stay resident; stream via a
    # K / out-N grid axis + VMEM accumulator instead (see module docstring).

    # ---- CostEstimate hint for the XLA scheduler ----------------------------
    layer_dims, prev_p = [], cin_p
    for co_p in outs_p:
        layer_dims.append((prev_p, co_p))
        prev_p = co_p
    flops = 2 * n_pad * sum(a * b for a, b in layer_dims)
    transcend = 0
    if activation in ("elu", "tanh"):
        transcend += n_pad * sum(outs_p[:-1])
    if use_ln:
        transcend += n_pad * num_hidden  # one rsqrt per row per LN
    bytes_accessed = (int(x_p.size) * x_p.dtype.itemsize + param_bytes
                      + n_pad * cout_p * out_itemsize)
    cost = pl.CostEstimate(flops=int(flops), transcendentals=int(transcend),
                           bytes_accessed=int(bytes_accessed))

    def run(single_buffer_params):
        in_specs = [pl.BlockSpec((tm, cin_p), lambda i: (i, 0))]
        for shp in shapes:
            if single_buffer_params:
                # constant index_map -> fetched once; single-buffer it so it
                # doesn't occupy 2x its size in VMEM for no pipelining benefit
                in_specs.append(pl.BlockSpec(shp, lambda i: (0, 0),
                                             pipeline_mode=pl.Buffered(1)))
            else:
                in_specs.append(pl.BlockSpec(shp, lambda i: (0, 0)))
        return pl.pallas_call(
            kernel,
            out_shape=jax.ShapeDtypeStruct((n_pad, cout_p), x.dtype),
            grid=(n_pad // tm,),
            in_specs=in_specs,
            out_specs=pl.BlockSpec((tm, cout_p), lambda i: (i, 0)),
            compiler_params=pltpu.CompilerParams(
                dimension_semantics=("parallel",),
                vmem_limit_bytes=vmem_limit),
            cost_estimate=cost,
        )(x_p, *params)

    try:
        out = run(single_buffer_params=True)
    except Exception:
        # Compatibility guard: if this jax build rejects Buffered(1) on
        # pallas_call inputs, fall back to default double buffering.
        out = run(single_buffer_params=False)

    return out[:n, :outs_real[-1]]


# ---------------------------------------------------------------------------
# MLP parameter construction (deterministic, mirrors nn.Module.__init__)
# ---------------------------------------------------------------------------
def init_mlp_params(key, in_channels, hidden_channels, out_channels,
                    num_layers, use_ln=True):
    """Returns (lins, lns): lins = list of (wT [in, out], b [1, out]);
    lns = list of (gamma [1, h], beta [1, h])."""
    if num_layers == 1:
        dims = [(in_channels, out_channels)]
    else:
        dims = [(in_channels, hidden_channels)]
        dims += [(hidden_channels, hidden_channels)] * (num_layers - 2)
        dims.append((hidden_channels, out_channels))

    lins = []
    for (fan_in, fan_out) in dims:
        key, wk = jax.random.split(key)
        # kaiming_normal_(weight, nonlinearity='relu'): std = sqrt(2 / fan_in)
        std = (2.0 / fan_in) ** 0.5
        w = jax.random.normal(wk, (fan_out, fan_in), jnp.float32) * std
        key, bk = jax.random.split(key)
        bound = 1.0 / (fan_in ** 0.5)
        b = jax.random.uniform(bk, (1, fan_out), jnp.float32,
                               minval=-bound, maxval=bound)
        lins.append((jnp.asarray(w.T), b))  # store transposed weight [in, out]

    lns = []
    if use_ln and num_layers > 1:
        for _ in range(num_layers - 1):
            lns.append((jnp.ones((1, hidden_channels), jnp.float32),
                        jnp.zeros((1, hidden_channels), jnp.float32)))
    return lins, lns


# ---------------------------------------------------------------------------
# Reference (pure JAX) for correctness checking
# ---------------------------------------------------------------------------
def mlp_forward_ref(x, lins, lns, *, use_ln=True, residual=False,
                    activation="relu", mxu_dtype=jnp.float32):
    def mm(a, wT):
        return jnp.dot(a.astype(mxu_dtype), wT.astype(mxu_dtype),
                       preferred_element_type=jnp.float32)

    x = x.astype(jnp.float32)
    x_prev = x
    for i, (wT, b) in enumerate(lins[:-1]):
        y = mm(x, wT) + b.reshape(1, -1)
        y = _apply_activation(y, activation)
        if use_ln:
            g, be = lns[i]
            m = jnp.mean(y, -1, keepdims=True)
            v = jnp.mean((y - m) ** 2, -1, keepdims=True)
            y = (y - m) / jnp.sqrt(v + LN_EPS) * g.reshape(1, -1) + be.reshape(1, -1)
        if residual and x_prev.shape == y.shape:
            y = y + x_prev
        x = y
        x_prev = x
    y = mm(x, lins[-1][0]) + lins[-1][1].reshape(1, -1)
    if residual and x_prev.shape == y.shape:
        y = y + x_prev
    return y


# ---------------------------------------------------------------------------
# Self-test
# ---------------------------------------------------------------------------
if __name__ == "__main__":
    # TODO(synk): training-mode dropout with p > 0 is not implemented
    # (module default p=0.0 -> identity, which is what the kernel does).

    def run_case(key, in_c, hid_c, out_c, num_layers, n, use_ln, residual,
                 activation="relu", mxu_dtype=jnp.bfloat16, tol=5e-3):
        key, xk, pk = jax.random.split(key, 3)
        x = jax.random.normal(xk, (n, in_c), jnp.float32)
        lins, lns = init_mlp_params(pk, in_c, hid_c, out_c, num_layers,
                                    use_ln=use_ln)
        packed = pack_mlp_params(lins, lns, use_ln=use_ln, mxu_dtype=mxu_dtype)
        out = mlp_forward(x, packed=packed, residual=residual,
                          activation=activation)
        out = jax.block_until_ready(out)
        ref = mlp_forward_ref(x, lins, lns, use_ln=use_ln, residual=residual,
                              activation=activation, mxu_dtype=mxu_dtype)
        assert out.shape == (n, out_c), out.shape
        err = float(jnp.max(jnp.abs(out - ref)))
        assert jnp.allclose(out, ref, atol=tol, rtol=tol), err
        return key

    key = jax.random.PRNGKey(0)
    # module-default config: MLP(4, 32, 8, num_layers=3), bf16 MXU path
    key = run_case(key, 4, 32, 8, 3, 16, use_ln=True, residual=False,
                   mxu_dtype=jnp.bfloat16, tol=5e-3)
    # residual path exercised (in == hidden == out), N not a multiple of 8
    key = run_case(key, 32, 32, 32, 3, 100, use_ln=True, residual=True,
                   mxu_dtype=jnp.bfloat16, tol=5e-3)
    # use_ln=False path + alternate activation, odd N, full-f32 MXU path
    key = run_case(key, 4, 32, 8, 2, 37, use_ln=False, residual=False,
                   activation="tanh", mxu_dtype=jnp.float32, tol=2e-4)

    print("KERNEL_OK")
</pallas_src>

<mosaic_0001>
module attributes {stable_mosaic.version = 11 : i64} {
  func.func @kernel(%arg0: i32, %arg1: memref<16x128xf32, #tpu.memory_space<vmem>>, %arg2: memref<128x128xbf16, #tpu.memory_space<vmem>>, %arg3: memref<1x128xf32, #tpu.memory_space<vmem>>, %arg4: memref<1x128xf32, #tpu.memory_space<vmem>>, %arg5: memref<1x128xf32, #tpu.memory_space<vmem>>, %arg6: memref<128x128xbf16, #tpu.memory_space<vmem>>, %arg7: memref<1x128xf32, #tpu.memory_space<vmem>>, %arg8: memref<1x128xf32, #tpu.memory_space<vmem>>, %arg9: memref<1x128xf32, #tpu.memory_space<vmem>>, %arg10: memref<128x128xbf16, #tpu.memory_space<vmem>>, %arg11: memref<1x128xf32, #tpu.memory_space<vmem>>, %arg12: memref<16x128xf32, #tpu.memory_space<vmem>>) attributes {dimension_semantics = [#tpu.dimension_semantics<parallel>], iteration_bounds = array<i64: 1>, scalar_prefetch = 0 : i64, scratch_operands = 0 : i64, tpu.core_type = #tpu.core_type<tc>, window_params = [{transform_indices = @transform_0, window_bounds = array<i64: 16, 128>}, {pipeline_mode = #tpu.pipeline_mode<synchronous>, transform_indices = @transform_1, window_bounds = array<i64: 128, 128>}, {pipeline_mode = #tpu.pipeline_mode<synchronous>, transform_indices = @transform_2, window_bounds = array<i64: 1, 128>}, {pipeline_mode = #tpu.pipeline_mode<synchronous>, transform_indices = @transform_3, window_bounds = array<i64: 1, 128>}, {pipeline_mode = #tpu.pipeline_mode<synchronous>, transform_indices = @transform_4, window_bounds = array<i64: 1, 128>}, {pipeline_mode = #tpu.pipeline_mode<synchronous>, transform_indices = @transform_5, window_bounds = array<i64: 128, 128>}, {pipeline_mode = #tpu.pipeline_mode<synchronous>, transform_indices = @transform_6, window_bounds = array<i64: 1, 128>}, {pipeline_mode = #tpu.pipeline_mode<synchronous>, transform_indices = @transform_7, window_bounds = array<i64: 1, 128>}, {pipeline_mode = #tpu.pipeline_mode<synchronous>, transform_indices = @transform_8, window_bounds = array<i64: 1, 128>}, {pipeline_mode = #tpu.pipeline_mode<synchronous>, transform_indices = @transform_9, window_bounds = array<i64: 128, 128>}, {pipeline_mode = #tpu.pipeline_mode<synchronous>, transform_indices = @transform_10, window_bounds = array<i64: 1, 128>}, {transform_indices = @transform_11, window_bounds = array<i64: 16, 128>}]} {
    %c0 = arith.constant 0 : index
    %c0_0 = arith.constant 0 : index
    %0 = vector.load %arg1[%c0, %c0_0] : memref<16x128xf32, #tpu.memory_space<vmem>>, vector<16x128xf32>
    %c0_1 = arith.constant 0 : index
    %c0_2 = arith.constant 0 : index
    %1 = vector.load %arg2[%c0_1, %c0_2] : memref<128x128xbf16, #tpu.memory_space<vmem>>, vector<128x128xbf16>
    %c0_3 = arith.constant 0 : index
    %c0_4 = arith.constant 0 : index
    %2 = vector.load %arg3[%c0_3, %c0_4] : memref<1x128xf32, #tpu.memory_space<vmem>>, vector<1x128xf32>
    %3 = arith.truncf %0 : vector<16x128xf32> to vector<16x128xbf16>
    %cst = arith.constant dense<0.000000e+00> : vector<16x128xf32>
    %4 = tpu.matmul %3, %1, %cst {dimension_numbers = #tpu.dot_dimension_numbers<[1], [0], [0], [1], [0, 0, 1, 1], [], []>} : vector<16x128xbf16>, vector<128x128xbf16>, vector<16x128xf32> -> vector<16x128xf32>
    %5 = vector.broadcast %2 : vector<1x128xf32> to vector<16x128xf32>
    %6 = arith.addf %4, %5 : vector<16x128xf32>
    %cst_5 = arith.constant 0.000000e+00 : f32
    %7 = vector.broadcast %cst_5 : f32 to vector<16x128xf32>
    %8 = arith.maximumf %6, %7 : vector<16x128xf32>
    %c0_6 = arith.constant 0 : index
    %c0_7 = arith.constant 0 : index
    %9 = vector.load %arg4[%c0_6, %c0_7] : memref<1x128xf32, #tpu.memory_space<vmem>>, vector<1x128xf32>
    %c0_8 = arith.constant 0 : index
    %c0_9 = arith.constant 0 : index
    %10 = vector.load %arg5[%c0_8, %c0_9] : memref<1x128xf32, #tpu.memory_space<vmem>>, vector<1x128xf32>
    %cst_10 = arith.constant dense<0.000000e+00> : vector<16xf32>
    %11 = vector.multi_reduction <add>, %8, %cst_10 [1] : vector<16x128xf32> to vector<16xf32>
    %12 = vector.shape_cast %11 : vector<16xf32> to vector<16x1xf32>
    %13 = arith.mulf %8, %8 : vector<16x128xf32>
    %cst_11 = arith.constant dense<0.000000e+00> : vector<16xf32>
    %14 = vector.multi_reduction <add>, %13, %cst_11 [1] : vector<16x128xf32> to vector<16xf32>
    %15 = vector.shape_cast %14 : vector<16xf32> to vector<16x1xf32>
    %cst_12 = arith.constant 3.125000e-02 : f32
    %16 = vector.broadcast %cst_12 : f32 to vector<16x1xf32>
    %17 = arith.mulf %12, %16 : vector<16x1xf32>
    %cst_13 = arith.constant 3.125000e-02 : f32
    %18 = vector.broadcast %cst_13 : f32 to vector<16x1xf32>
    %19 = arith.mulf %15, %18 : vector<16x1xf32>
    %20 = arith.mulf %17, %17 : vector<16x1xf32>
    %21 = arith.subf %19, %20 : vector<16x1xf32>
    %cst_14 = arith.constant 0.000000e+00 : f32
    %22 = vector.broadcast %cst_14 : f32 to vector<16x1xf32>
    %23 = arith.maximumf %21, %22 : vector<16x1xf32>
    %24 = vector.broadcast %17 : vector<16x1xf32> to vector<16x128xf32>
    %25 = arith.subf %8, %24 : vector<16x128xf32>
    %cst_15 = arith.constant 9.99999974E-6 : f32
    %26 = vector.broadcast %cst_15 : f32 to vector<16x1xf32>
    %27 = arith.addf %23, %26 : vector<16x1xf32>
    %28 = math.rsqrt %27 : vector<16x1xf32>
    %29 = vector.broadcast %28 : vector<16x1xf32> to vector<16x128xf32>
    %30 = arith.mulf %25, %29 : vector<16x128xf32>
    %31 = vector.broadcast %9 : vector<1x128xf32> to vector<16x128xf32>
    %32 = arith.mulf %30, %31 : vector<16x128xf32>
    %33 = vector.broadcast %10 : vector<1x128xf32> to vector<16x128xf32>
    %34 = arith.addf %32, %33 : vector<16x128xf32>
    %c0_16 = arith.constant 0 : index
    %c0_17 = arith.constant 0 : index
    %35 = vector.load %arg6[%c0_16, %c0_17] : memref<128x128xbf16, #tpu.memory_space<vmem>>, vector<128x128xbf16>
    %c0_18 = arith.constant 0 : index
    %c0_19 = arith.constant 0 : index
    %36 = vector.load %arg7[%c0_18, %c0_19] : memref<1x128xf32, #tpu.memory_space<vmem>>, vector<1x128xf32>
    %37 = arith.truncf %34 : vector<16x128xf32> to vector<16x128xbf16>
    %cst_20 = arith.constant dense<0.000000e+00> : vector<16x128xf32>
    %38 = tpu.matmul %37, %35, %cst_20 {dimension_numbers = #tpu.dot_dimension_numbers<[1], [0], [0], [1], [0, 0, 1, 1], [], []>} : vector<16x128xbf16>, vector<128x128xbf16>, vector<16x128xf32> -> vector<16x128xf32>
    %39 = vector.broadcast %36 : vector<1x128xf32> to vector<16x128xf32>
    %40 = arith.addf %38, %39 : vector<16x128xf32>
    %cst_21 = arith.constant 0.000000e+00 : f32
    %41 = vector.broadcast %cst_21 : f32 to vector<16x128xf32>
    %42 = arith.maximumf %40, %41 : vector<16x128xf32>
    %c0_22 = arith.constant 0 : index
    %c0_23 = arith.constant 0 : index
    %43 = vector.load %arg8[%c0_22, %c0_23] : memref<1x128xf32, #tpu.memory_space<vmem>>, vector<1x128xf32>
    %c0_24 = arith.constant 0 : index
    %c0_25 = arith.constant 0 : index
    %44 = vector.load %arg9[%c0_24, %c0_25] : memref<1x128xf32, #tpu.memory_space<vmem>>, vector<1x128xf32>
    %cst_26 = arith.constant dense<0.000000e+00> : vector<16xf32>
    %45 = vector.multi_reduction <add>, %42, %cst_26 [1] : vector<16x128xf32> to vector<16xf32>
    %46 = vector.shape_cast %45 : vector<16xf32> to vector<16x1xf32>
    %47 = arith.mulf %42, %42 : vector<16x128xf32>
    %cst_27 = arith.constant dense<0.000000e+00> : vector<16xf32>
    %48 = vector.multi_reduction <add>, %47, %cst_27 [1] : vector<16x128xf32> to vector<16xf32>
    %49 = vector.shape_cast %48 : vector<16xf32> to vector<16x1xf32>
    %cst_28 = arith.constant 3.125000e-02 : f32
    %50 = vector.broadcast %cst_28 : f32 to vector<16x1xf32>
    %51 = arith.mulf %46, %50 : vector<16x1xf32>
    %cst_29 = arith.constant 3.125000e-02 : f32
    %52 = vector.broadcast %cst_29 : f32 to vector<16x1xf32>
    %53 = arith.mulf %49, %52 : vector<16x1xf32>
    %54 = arith.mulf %51, %51 : vector<16x1xf32>
    %55 = arith.subf %53, %54 : vector<16x1xf32>
    %cst_30 = arith.constant 0.000000e+00 : f32
    %56 = vector.broadcast %cst_30 : f32 to vector<16x1xf32>
    %57 = arith.maximumf %55, %56 : vector<16x1xf32>
    %58 = vector.broadcast %51 : vector<16x1xf32> to vector<16x128xf32>
    %59 = arith.subf %42, %58 : vector<16x128xf32>
    %cst_31 = arith.constant 9.99999974E-6 : f32
    %60 = vector.broadcast %cst_31 : f32 to vector<16x1xf32>
    %61 = arith.addf %57, %60 : vector<16x1xf32>
    %62 = math.rsqrt %61 : vector<16x1xf32>
    %63 = vector.broadcast %62 : vector<16x1xf32> to vector<16x128xf32>
    %64 = arith.mulf %59, %63 : vector<16x128xf32>
    %65 = vector.broadcast %43 : vector<1x128xf32> to vector<16x128xf32>
    %66 = arith.mulf %64, %65 : vector<16x128xf32>
    %67 = vector.broadcast %44 : vector<1x128xf32> to vector<16x128xf32>
    %68 = arith.addf %66, %67 : vector<16x128xf32>
    %c0_32 = arith.constant 0 : index
    %c0_33 = arith.constant 0 : index
    %69 = vector.load %arg10[%c0_32, %c0_33] : memref<128x128xbf16, #tpu.memory_space<vmem>>, vector<128x128xbf16>
    %c0_34 = arith.constant 0 : index
    %c0_35 = arith.constant 0 : index
    %70 = vector.load %arg11[%c0_34, %c0_35] : memref<1x128xf32, #tpu.memory_space<vmem>>, vector<1x128xf32>
    %71 = arith.truncf %68 : vector<16x128xf32> to vector<16x128xbf16>
    %cst_36 = arith.constant dense<0.000000e+00> : vector<16x128xf32>
    %72 = tpu.matmul %71, %69, %cst_36 {dimension_numbers = #tpu.dot_dimension_numbers<[1], [0], [0], [1], [0, 0, 1, 1], [], []>} : vector<16x128xbf16>, vector<128x128xbf16>, vector<16x128xf32> -> vector<16x128xf32>
    %73 = vector.broadcast %70 : vector<1x128xf32> to vector<16x128xf32>
    %74 = arith.addf %72, %73 : vector<16x128xf32>
    %c0_37 = arith.constant 0 : index
    %c0_38 = arith.constant 0 : index
    %75 = vector.load %arg12[%c0_37, %c0_38] : memref<16x128xf32, #tpu.memory_space<vmem>>, vector<16x128xf32>
    tpu.vector_store %arg12[%c0_37, %c0_38], %74 {strides = array<i32>} : memref<16x128xf32, #tpu.memory_space<vmem>>, vector<16x128xf32>,
    return
  }
  func.func @transform_0(%arg0: i32) -> (i32, i32) {
    %c0_i32 = arith.constant 0 : i32
    %c0_i32_0 = arith.constant 0 : i32
    return %arg0, %c0_i32 : i32, i32
  }
  func.func @transform_1(%arg0: i32) -> (i32, i32) {
    %c0_i32 = arith.constant 0 : i32
    %c0_i32_0 = arith.constant 0 : i32
    %c0_i32_1 = arith.constant 0 : i32
    return %c0_i32, %c0_i32_0 : i32, i32
  }
  func.func @transform_2(%arg0: i32) -> (i32, i32) {
    %c0_i32 = arith.constant 0 : i32
    %c0_i32_0 = arith.constant 0 : i32
    %c0_i32_1 = arith.constant 0 : i32
    return %c0_i32, %c0_i32_0 : i32, i32
  }
  func.func @transform_3(%arg0: i32) -> (i32, i32) {
    %c0_i32 = arith.constant 0 : i32
    %c0_i32_0 = arith.constant 0 : i32
    %c0_i32_1 = arith.constant 0 : i32
    return %c0_i32, %c0_i32_0 : i32, i32
  }
  func.func @transform_4(%arg0: i32) -> (i32, i32) {
    %c0_i32 = arith.constant 0 : i32
    %c0_i32_0 = arith.constant 0 : i32
    %c0_i32_1 = arith.constant 0 : i32
    return %c0_i32, %c0_i32_0 : i32, i32
  }
  func.func @transform_5(%arg0: i32) -> (i32, i32) {
    %c0_i32 = arith.constant 0 : i32
    %c0_i32_0 = arith.constant 0 : i32
    %c0_i32_1 = arith.constant 0 : i32
    return %c0_i32, %c0_i32_0 : i32, i32
  }
  func.func @transform_6(%arg0: i32) -> (i32, i32) {
    %c0_i32 = arith.constant 0 : i32
    %c0_i32_0 = arith.constant 0 : i32
    %c0_i32_1 = arith.constant 0 : i32
    return %c0_i32, %c0_i32_0 : i32, i32
  }
  func.func @transform_7(%arg0: i32) -> (i32, i32) {
    %c0_i32 = arith.constant 0 : i32
    %c0_i32_0 = arith.constant 0 : i32
    %c0_i32_1 = arith.constant 0 : i32
    return %c0_i32, %c0_i32_0 : i32, i32
  }
  func.func @transform_8(%arg0: i32) -> (i32, i32) {
    %c0_i32 = arith.constant 0 : i32
    %c0_i32_0 = arith.constant 0 : i32
    %c0_i32_1 = arith.constant 0 : i32
    return %c0_i32, %c0_i32_0 : i32, i32
  }
  func.func @transform_9(%arg0: i32) -> (i32, i32) {
    %c0_i32 = arith.constant 0 : i32
    %c0_i32_0 = arith.constant 0 : i32
    %c0_i32_1 = arith.constant 0 : i32
    return %c0_i32, %c0_i32_0 : i32, i32
  }
  func.func @transform_10(%arg0: i32) -> (i32, i32) {
    %c0_i32 = arith.constant 0 : i32
    %c0_i32_0 = arith.constant 0 : i32
    %c0_i32_1 = arith.constant 0 : i32
    return %c0_i32, %c0_i32_0 : i32, i32
  }
  func.func @transform_11(%arg0: i32) -> (i32, i32) {
    %c0_i32 = arith.constant 0 : i32
    %c0_i32_0 = arith.constant 0 : i32
    return %arg0, %c0_i32 : i32, i32
  }
}

module attributes {stable_mosaic.version = 11 : i64} {
  func.func @kernel(%arg0: i32, %arg1: memref<16x128xf32, #tpu.memory_space<vmem>>, %arg2: memref<128x128xbf16, #tpu.memory_space<vmem>>, %arg3: memref<1x128xf32, #tpu.memory_space<vmem>>, %arg4: memref<1x128xf32, #tpu.memory_space<vmem>>, %arg5: memref<1x128xf32, #tpu.memory_space<vmem>>, %arg6: memref<128x128xbf16, #tpu.memory_space<vmem>>, %arg7: memref<1x128xf32, #tpu.memory_space<vmem>>, %arg8: memref<1x128xf32, #tpu.memory_space<vmem>>, %arg9: memref<1x128xf32, #tpu.memory_space<vmem>>, %arg10: memref<128x128xbf16, #tpu.memory_space<vmem>>, %arg11: memref<1x128xf32, #tpu.memory_space<vmem>>, %arg12: memref<16x128xf32, #tpu.memory_space<vmem>>) attributes {dimension_semantics = [#tpu.dimension_semantics<parallel>], iteration_bounds = array<i64: 1>, scalar_prefetch = 0 : i64, scratch_operands = 0 : i64, tpu.core_type = #tpu.core_type<tc>, window_params = [{transform_indices = @transform_0, window_bounds = array<i64: 16, 128>}, {pipeline_mode = #tpu.pipeline_mode<synchronous>, transform_indices = @transform_1, window_bounds = array<i64: 128, 128>}, {pipeline_mode = #tpu.pipeline_mode<synchronous>, transform_indices = @transform_2, window_bounds = array<i64: 1, 128>}, {pipeline_mode = #tpu.pipeline_mode<synchronous>, transform_indices = @transform_3, window_bounds = array<i64: 1, 128>}, {pipeline_mode = #tpu.pipeline_mode<synchronous>, transform_indices = @transform_4, window_bounds = array<i64: 1, 128>}, {pipeline_mode = #tpu.pipeline_mode<synchronous>, transform_indices = @transform_5, window_bounds = array<i64: 128, 128>}, {pipeline_mode = #tpu.pipeline_mode<synchronous>, transform_indices = @transform_6, window_bounds = array<i64: 1, 128>}, {pipeline_mode = #tpu.pipeline_mode<synchronous>, transform_indices = @transform_7, window_bounds = array<i64: 1, 128>}, {pipeline_mode = #tpu.pipeline_mode<synchronous>, transform_indices = @transform_8, window_bounds = array<i64: 1, 128>}, {pipeline_mode = #tpu.pipeline_mode<synchronous>, transform_indices = @transform_9, window_bounds = array<i64: 128, 128>}, {pipeline_mode = #tpu.pipeline_mode<synchronous>, transform_indices = @transform_10, window_bounds = array<i64: 1, 128>}, {transform_indices = @transform_11, window_bounds = array<i64: 16, 128>}]} {
    %c0 = arith.constant 0 : index
    %c0_0 = arith.constant 0 : index
    %0 = vector.load %arg1[%c0, %c0_0] : memref<16x128xf32, #tpu.memory_space<vmem>>, vector<16x128xf32>
    %c0_1 = arith.constant 0 : index
    %c0_2 = arith.constant 0 : index
    %1 = vector.load %arg2[%c0_1, %c0_2] : memref<128x128xbf16, #tpu.memory_space<vmem>>, vector<128x128xbf16>
    %c0_3 = arith.constant 0 : index
    %c0_4 = arith.constant 0 : index
    %2 = vector.load %arg3[%c0_3, %c0_4] : memref<1x128xf32, #tpu.memory_space<vmem>>, vector<1x128xf32>
    %3 = arith.truncf %0 : vector<16x128xf32> to vector<16x128xbf16>
    %cst = arith.constant dense<0.000000e+00> : vector<16x128xf32>
    %4 = tpu.matmul %3, %1, %cst {dimension_numbers = #tpu.dot_dimension_numbers<[1], [0], [0], [1], [0, 0, 1, 1], [], []>} : vector<16x128xbf16>, vector<128x128xbf16>, vector<16x128xf32> -> vector<16x128xf32>
    %5 = vector.broadcast %2 : vector<1x128xf32> to vector<16x128xf32>
    %6 = arith.addf %4, %5 : vector<16x128xf32>
    %cst_5 = arith.constant 0.000000e+00 : f32
    %7 = vector.broadcast %cst_5 : f32 to vector<16x128xf32>
    %8 = arith.maximumf %6, %7 : vector<16x128xf32>
    %c0_6 = arith.constant 0 : index
    %c0_7 = arith.constant 0 : index
    %9 = vector.load %arg4[%c0_6, %c0_7] : memref<1x128xf32, #tpu.memory_space<vmem>>, vector<1x128xf32>
    %c0_8 = arith.constant 0 : index
    %c0_9 = arith.constant 0 : index
    %10 = vector.load %arg5[%c0_8, %c0_9] : memref<1x128xf32, #tpu.memory_space<vmem>>, vector<1x128xf32>
    %cst_10 = arith.constant dense<0.000000e+00> : vector<16xf32>
    %11 = vector.multi_reduction <add>, %8, %cst_10 [1] : vector<16x128xf32> to vector<16xf32>
    %12 = vector.shape_cast %11 : vector<16xf32> to vector<16x1xf32>
    %13 = arith.mulf %8, %8 : vector<16x128xf32>
    %cst_11 = arith.constant dense<0.000000e+00> : vector<16xf32>
    %14 = vector.multi_reduction <add>, %13, %cst_11 [1] : vector<16x128xf32> to vector<16xf32>
    %15 = vector.shape_cast %14 : vector<16xf32> to vector<16x1xf32>
    %cst_12 = arith.constant 3.125000e-02 : f32
    %16 = vector.broadcast %cst_12 : f32 to vector<16x1xf32>
    %17 = arith.mulf %12, %16 : vector<16x1xf32>
    %cst_13 = arith.constant 3.125000e-02 : f32
    %18 = vector.broadcast %cst_13 : f32 to vector<16x1xf32>
    %19 = arith.mulf %15, %18 : vector<16x1xf32>
    %20 = arith.mulf %17, %17 : vector<16x1xf32>
    %21 = arith.subf %19, %20 : vector<16x1xf32>
    %cst_14 = arith.constant 0.000000e+00 : f32
    %22 = vector.broadcast %cst_14 : f32 to vector<16x1xf32>
    %23 = arith.maximumf %21, %22 : vector<16x1xf32>
    %24 = vector.broadcast %17 : vector<16x1xf32> to vector<16x128xf32>
    %25 = arith.subf %8, %24 : vector<16x128xf32>
    %cst_15 = arith.constant 9.99999974E-6 : f32
    %26 = vector.broadcast %cst_15 : f32 to vector<16x1xf32>
    %27 = arith.addf %23, %26 : vector<16x1xf32>
    %28 = math.rsqrt %27 : vector<16x1xf32>
    %29 = vector.broadcast %28 : vector<16x1xf32> to vector<16x128xf32>
    %30 = arith.mulf %25, %29 : vector<16x128xf32>
    %31 = vector.broadcast %9 : vector<1x128xf32> to vector<16x128xf32>
    %32 = arith.mulf %30, %31 : vector<16x128xf32>
    %33 = vector.broadcast %10 : vector<1x128xf32> to vector<16x128xf32>
    %34 = arith.addf %32, %33 : vector<16x128xf32>
    %c0_16 = arith.constant 0 : index
    %c0_17 = arith.constant 0 : index
    %35 = vector.load %arg6[%c0_16, %c0_17] : memref<128x128xbf16, #tpu.memory_space<vmem>>, vector<128x128xbf16>
    %c0_18 = arith.constant 0 : index
    %c0_19 = arith.constant 0 : index
    %36 = vector.load %arg7[%c0_18, %c0_19] : memref<1x128xf32, #tpu.memory_space<vmem>>, vector<1x128xf32>
    %37 = arith.truncf %34 : vector<16x128xf32> to vector<16x128xbf16>
    %cst_20 = arith.constant dense<0.000000e+00> : vector<16x128xf32>
    %38 = tpu.matmul %37, %35, %cst_20 {dimension_numbers = #tpu.dot_dimension_numbers<[1], [0], [0], [1], [0, 0, 1, 1], [], []>} : vector<16x128xbf16>, vector<128x128xbf16>, vector<16x128xf32> -> vector<16x128xf32>
    %39 = vector.broadcast %36 : vector<1x128xf32> to vector<16x128xf32>
    %40 = arith.addf %38, %39 : vector<16x128xf32>
    %cst_21 = arith.constant 0.000000e+00 : f32
    %41 = vector.broadcast %cst_21 : f32 to vector<16x128xf32>
    %42 = arith.maximumf %40, %41 : vector<16x128xf32>
    %c0_22 = arith.constant 0 : index
    %c0_23 = arith.constant 0 : index
    %43 = vector.load %arg8[%c0_22, %c0_23] : memref<1x128xf32, #tpu.memory_space<vmem>>, vector<1x128xf32>
    %c0_24 = arith.constant 0 : index
    %c0_25 = arith.constant 0 : index
    %44 = vector.load %arg9[%c0_24, %c0_25] : memref<1x128xf32, #tpu.memory_space<vmem>>, vector<1x128xf32>
    %cst_26 = arith.constant dense<0.000000e+00> : vector<16xf32>
    %45 = vector.multi_reduction <add>, %42, %cst_26 [1] : vector<16x128xf32> to vector<16xf32>
    %46 = vector.shape_cast %45 : vector<16xf32> to vector<16x1xf32>
    %47 = arith.mulf %42, %42 : vector<16x128xf32>
    %cst_27 = arith.constant dense<0.000000e+00> : vector<16xf32>
    %48 = vector.multi_reduction <add>, %47, %cst_27 [1] : vector<16x128xf32> to vector<16xf32>
    %49 = vector.shape_cast %48 : vector<16xf32> to vector<16x1xf32>
    %cst_28 = arith.constant 3.125000e-02 : f32
    %50 = vector.broadcast %cst_28 : f32 to vector<16x1xf32>
    %51 = arith.mulf %46, %50 : vector<16x1xf32>
    %cst_29 = arith.constant 3.125000e-02 : f32
    %52 = vector.broadcast %cst_29 : f32 to vector<16x1xf32>
    %53 = arith.mulf %49, %52 : vector<16x1xf32>
    %54 = arith.mulf %51, %51 : vector<16x1xf32>
    %55 = arith.subf %53, %54 : vector<16x1xf32>
    %cst_30 = arith.constant 0.000000e+00 : f32
    %56 = vector.broadcast %cst_30 : f32 to vector<16x1xf32>
    %57 = arith.maximumf %55, %56 : vector<16x1xf32>
    %58 = vector.broadcast %51 : vector<16x1xf32> to vector<16x128xf32>
    %59 = arith.subf %42, %58 : vector<16x128xf32>
    %cst_31 = arith.constant 9.99999974E-6 : f32
    %60 = vector.broadcast %cst_31 : f32 to vector<16x1xf32>
    %61 = arith.addf %57, %60 : vector<16x1xf32>
    %62 = math.rsqrt %61 : vector<16x1xf32>
    %63 = vector.broadcast %62 : vector<16x1xf32> to vector<16x128xf32>
    %64 = arith.mulf %59, %63 : vector<16x128xf32>
    %65 = vector.broadcast %43 : vector<1x128xf32> to vector<16x128xf32>
    %66 = arith.mulf %64, %65 : vector<16x128xf32>
    %67 = vector.broadcast %44 : vector<1x128xf32> to vector<16x128xf32>
    %68 = arith.addf %66, %67 : vector<16x128xf32>
    %c0_32 = arith.constant 0 : index
    %c0_33 = arith.constant 0 : index
    %69 = vector.load %arg10[%c0_32, %c0_33] : memref<128x128xbf16, #tpu.memory_space<vmem>>, vector<128x128xbf16>
    %c0_34 = arith.constant 0 : index
    %c0_35 = arith.constant 0 : index
    %70 = vector.load %arg11[%c0_34, %c0_35] : memref<1x128xf32, #tpu.memory_space<vmem>>, vector<1x128xf32>
    %71 = arith.truncf %68 : vector<16x128xf32> to vector<16x128xbf16>
    %cst_36 = arith.constant dense<0.000000e+00> : vector<16x128xf32>
    %72 = tpu.matmul %71, %69, %cst_36 {dimension_numbers = #tpu.dot_dimension_numbers<[1], [0], [0], [1], [0, 0, 1, 1], [], []>} : vector<16x128xbf16>, vector<128x128xbf16>, vector<16x128xf32> -> vector<16x128xf32>
    %73 = vector.broadcast %70 : vector<1x128xf32> to vector<16x128xf32>
    %74 = arith.addf %72, %73 : vector<16x128xf32>
    %c0_37 = arith.constant 0 : index
    %c0_38 = arith.constant 0 : index
    %75 = vector.load %arg12[%c0_37, %c0_38] : memref<16x128xf32, #tpu.memory_space<vmem>>, vector<16x128xf32>
    tpu.vector_store %arg12[%c0_37, %c0_38], %74 {strides = array<i32>} : memref<16x128xf32, #tpu.memory_space<vmem>>, vector<16x128xf32>,
    return
  }
  func.func @transform_0(%arg0: i32) -> (i32, i32) {
    %c0_i32 = arith.constant 0 : i32
    %c0_i32_0 = arith.constant 0 : i32
    return %arg0, %c0_i32 : i32, i32
  }
  func.func @transform_1(%arg0: i32) -> (i32, i32) {
    %c0_i32 = arith.constant 0 : i32
    %c0_i32_0 = arith.constant 0 : i32
    %c0_i32_1 = arith.constant 0 : i32
    return %c0_i32, %c0_i32_0 : i32, i32
  }
  func.func @transform_2(%arg0: i32) -> (i32, i32) {
    %c0_i32 = arith.constant 0 : i32
    %c0_i32_0 = arith.constant 0 : i32
    %c0_i32_1 = arith.constant 0 : i32
    return %c0_i32, %c0_i32_0 : i32, i32
  }
  func.func @transform_3(%arg0: i32) -> (i32, i32) {
    %c0_i32 = arith.constant 0 : i32
    %c0_i32_0 = arith.constant 0 : i32
    %c0_i32_1 = arith.constant 0 : i32
    return %c0_i32, %c0_i32_0 : i32, i32
  }
  func.func @transform_4(%arg0: i32) -> (i32, i32) {
    %c0_i32 = arith.constant 0 : i32
    %c0_i32_0 = arith.constant 0 : i32
    %c0_i32_1 = arith.constant 0 : i32
    return %c0_i32, %c0_i32_0 : i32, i32
  }
  func.func @transform_5(%arg0: i32) -> (i32, i32) {
    %c0_i32 = arith.constant 0 : i32
    %c0_i32_0 = arith.constant 0 : i32
    %c0_i32_1 = arith.constant 0 : i32
    return %c0_i32, %c0_i32_0 : i32, i32
  }
  func.func @transform_6(%arg0: i32) -> (i32, i32) {
    %c0_i32 = arith.constant 0 : i32
    %c0_i32_0 = arith.constant 0 : i32
    %c0_i32_1 = arith.constant 0 : i32
    return %c0_i32, %c0_i32_0 : i32, i32
  }
  func.func @transform_7(%arg0: i32) -> (i32, i32) {
    %c0_i32 = arith.constant 0 : i32
    %c0_i32_0 = arith.constant 0 : i32
    %c0_i32_1 = arith.constant 0 : i32
    return %c0_i32, %c0_i32_0 : i32, i32
  }
  func.func @transform_8(%arg0: i32) -> (i32, i32) {
    %c0_i32 = arith.constant 0 : i32
    %c0_i32_0 = arith.constant 0 : i32
    %c0_i32_1 = arith.constant 0 : i32
    return %c0_i32, %c0_i32_0 : i32, i32
  }
  func.func @transform_9(%arg0: i32) -> (i32, i32) {
    %c0_i32 = arith.constant 0 : i32
    %c0_i32_0 = arith.constant 0 : i32
    %c0_i32_1 = arith.constant 0 : i32
    return %c0_i32, %c0_i32_0 : i32, i32
  }
  func.func @transform_10(%arg0: i32) -> (i32, i32) {
    %c0_i32 = arith.constant 0 : i32
    %c0_i32_0 = arith.constant 0 : i32
    %c0_i32_1 = arith.constant 0 : i32
    return %c0_i32, %c0_i32_0 : i32, i32
  }
  func.func @transform_11(%arg0: i32) -> (i32, i32) {
    %c0_i32 = arith.constant 0 : i32
    %c0_i32_0 = arith.constant 0 : i32
    return %arg0, %c0_i32 : i32, i32
  }
}

</mosaic_0001>

<llo_original>
// kernel: tpu_custom_call.1
$region0: #{tpu_custom_call.1}
  #allocation0 [shape = 'u32[]', space=smem, size = 0x4, offset = 0x4, fixed_abs, tag = 'smem constant byte address 0x4 - core index']
  #allocation1 [shape = 'u32[144,128]{1,0:T(1,128)}', space=vmem, size = 0x12000, scoped, tag = 'internal scratch']
  %s0 = inlined_call_operand.hbm [shape: f32[16,128], index: 0, kind: input, shape index: {}]
  %s1 = inlined_call_operand.hbm [shape: bf16[128,128], index: 1, kind: input, shape index: {}]
  %s2 = inlined_call_operand.vmem [shape: f32[1,128], index: 2, kind: input, shape index: {}]
  %s3 = inlined_call_operand.vmem [shape: f32[1,128], index: 3, kind: input, shape index: {}]
  %s4 = inlined_call_operand.vmem [shape: f32[1,128], index: 4, kind: input, shape index: {}]
  %s5 = inlined_call_operand.hbm [shape: bf16[128,128], index: 5, kind: input, shape index: {}]
  %s6 = inlined_call_operand.vmem [shape: f32[1,128], index: 6, kind: input, shape index: {}]
  %s7 = inlined_call_operand.vmem [shape: f32[1,128], index: 7, kind: input, shape index: {}]
  %s8 = inlined_call_operand.vmem [shape: f32[1,128], index: 8, kind: input, shape index: {}]
  %s9 = inlined_call_operand.hbm [shape: bf16[128,128], index: 9, kind: input, shape index: {}]
  %s10 = inlined_call_operand.vmem [shape: f32[1,128], index: 10, kind: input, shape index: {}]
  %s11 = inlined_call_operand.hbm [shape: f32[16,128], index: 11, kind: output, shape index: {}]
  %s12 = sld [smem:[#allocation0]]
  $region70: #{tpu_custom_call.1} parent=0
    _
  %s14 = ssub.s32 1, %s12
  %s15 = scalar_select 0, %s14, %s12
  $region1: #{tpu_custom_call.1} parent=0
    #allocation2 [shape = 'u8[8192]{0}', space=vmem, size = 0x2000, scoped, tag = 'input window, operand 0, single buffered']
    #allocation3 [shape = 's32[1]{0}', space=sflag, size = 0x4, scoped, tag = 'scoped memory for tpu_custom_call.1']
    #allocation4 [shape = 's32[1]{0}', space=sflag, size = 0x4, scoped, tag = 'scoped memory for tpu_custom_call.1']
    #allocation5 [shape = 'u8[32768]{0}', space=vmem, size = 0x8000, scoped, tag = 'input window, operand 1, single buffered']
    #allocation6 [shape = 's32[1]{0}', space=sflag, size = 0x4, scoped, tag = 'scoped memory for tpu_custom_call.1']
    #allocation7 [shape = 'u8[32768]{0}', space=vmem, size = 0x8000, scoped, tag = 'input window, operand 5, single buffered']
    #allocation8 [shape = 'u8[32768]{0}', space=vmem, size = 0x8000, scoped, tag = 'input window, operand 9, single buffered']
    #allocation9 [shape = 's32[1]{0}', space=sflag, size = 0x4, scoped, tag = 'scoped memory for tpu_custom_call.1']
    #allocation10 [shape = 'u8[8192]{0}', space=vmem, size = 0x2000, scoped, tag = 'output window, operand 0, single buffered']
    %16 = vsyncpa [#allocation3], 0
    %17 = vsyncpa [#allocation6], 0
    %18 = vsyncpa [#allocation9], 0
    %19 = vsyncpa [#allocation4], 0
    // Predicated region
    $region2: #{tpu_custom_call.1} parent=1 // pred_check
      _
    $region3: #{tpu_custom_call.1} parent=1 // pred_check_branch
      %21 = sbr.rel (0) target = $region5
    $region4: #{tpu_custom_call.1} parent=1 // pred_region
      %s23 = ssub.s32 256, 256
      %24 = vsyncadd [#allocation3], %s23
      %s25 = sshll.u32 [#allocation2], 4
      %s26 = int_to_ptr.vmem [resolvable:$true] %s25
      %31 = dma.hbm_to_vmem [thread:$0]  %s0, 256, %s26, [#allocation3], 128, 128, 8
    $region5: #{tpu_custom_call.1} parent=1 // pred_fallthru
      _
    // Predicated region
    $region6: #{tpu_custom_call.1} parent=1 // pred_check
      _
    $region7: #{tpu_custom_call.1} parent=1 // pred_check_branch
      %33 = sbr.rel (0) target = $region9
    $region8: #{tpu_custom_call.1} parent=1 // pred_region
      %s35 = ssub.s32 1024, 1024
      %36 = vsyncadd [#allocation6], %s35
      %s37 = sshll.u32 [#allocation5], 4
      %s38 = int_to_ptr.vmem [resolvable:$true] %s37
      %43 = dma.hbm_to_vmem [thread:$0]  %s1, 1024, %s38, [#allocation6], 64, 64, 4
    $region9: #{tpu_custom_call.1} parent=1 // pred_fallthru
      _
    // Predicated region
    $region10: #{tpu_custom_call.1} parent=1 // pred_check
      _
    $region11: #{tpu_custom_call.1} parent=1 // pred_check_branch
      %45 = sbr.rel (0) target = $region13
    $region12: #{tpu_custom_call.1} parent=1 // pred_region
      _
    $region13: #{tpu_custom_call.1} parent=1 // pred_fallthru
      _
    // Predicated region
    $region14: #{tpu_custom_call.1} parent=1 // pred_check
      _
    $region15: #{tpu_custom_call.1} parent=1 // pred_check_branch
      %47 = sbr.rel (0) target = $region17
    $region16: #{tpu_custom_call.1} parent=1 // pred_region
      _
    $region17: #{tpu_custom_call.1} parent=1 // pred_fallthru
      _
    // Predicated region
    $region18: #{tpu_custom_call.1} parent=1 // pred_check
      _
    $region19: #{tpu_custom_call.1} parent=1 // pred_check_branch
      %49 = sbr.rel (0) target = $region21
    $region20: #{tpu_custom_call.1} parent=1 // pred_region
      _
    $region21: #{tpu_custom_call.1} parent=1 // pred_fallthru
      _
    // Predicated region
    $region22: #{tpu_custom_call.1} parent=1 // pred_check
      _
    $region23: #{tpu_custom_call.1} parent=1 // pred_check_branch
      %51 = sbr.rel (0) target = $region25
    $region24: #{tpu_custom_call.1} parent=1 // pred_region
      %s53 = ssub.s32 1024, 1024
      %54 = vsyncadd [#allocation6], %s53
      %s55 = sshll.u32 [#allocation7], 4
      %s56 = int_to_ptr.vmem [resolvable:$true] %s55
      %61 = dma.hbm_to_vmem [thread:$0]  %s5, 1024, %s56, [#allocation6], 64, 64, 4
    $region25: #{tpu_custom_call.1} parent=1 // pred_fallthru
      _
    // Predicated region
    $region26: #{tpu_custom_call.1} parent=1 // pred_check
      _
    $region27: #{tpu_custom_call.1} parent=1 // pred_check_branch
      %63 = sbr.rel (0) target = $region29
    $region28: #{tpu_custom_call.1} parent=1 // pred_region
      _
    $region29: #{tpu_custom_call.1} parent=1 // pred_fallthru
      _
    // Predicated region
    $region30: #{tpu_custom_call.1} parent=1 // pred_check
      _
    $region31: #{tpu_custom_call.1} parent=1 // pred_check_branch
      %65 = sbr.rel (0) target = $region33
    $region32: #{tpu_custom_call.1} parent=1 // pred_region
      _
    $region33: #{tpu_custom_call.1} parent=1 // pred_fallthru
      _
    // Predicated region
    $region34: #{tpu_custom_call.1} parent=1 // pred_check
      _
    $region35: #{tpu_custom_call.1} parent=1 // pred_check_branch
      %67 = sbr.rel (0) target = $region37
    $region36: #{tpu_custom_call.1} parent=1 // pred_region
      _
    $region37: #{tpu_custom_call.1} parent=1 // pred_fallthru
      _
    // Predicated region
    $region38: #{tpu_custom_call.1} parent=1 // pred_check
      _
    $region39: #{tpu_custom_call.1} parent=1 // pred_check_branch
      %69 = sbr.rel (0) target = $region41
    $region40: #{tpu_custom_call.1} parent=1 // pred_region
      %s71 = ssub.s32 1024, 1024
      %72 = vsyncadd [#allocation9], %s71
      %s73 = sshll.u32 [#allocation8], 4
      %s74 = int_to_ptr.vmem [resolvable:$true] %s73
      %79 = dma.hbm_to_vmem [thread:$0]  %s9, 1024, %s74, [#allocation9], 64, 64, 4
    $region41: #{tpu_custom_call.1} parent=1 // pred_fallthru
      _
    // Predicated region
    $region42: #{tpu_custom_call.1} parent=1 // pred_check
      _
    $region43: #{tpu_custom_call.1} parent=1 // pred_check_branch
      %81 = sbr.rel (0) target = $region45
    $region44: #{tpu_custom_call.1} parent=1 // pred_region
      _
    $region45: #{tpu_custom_call.1} parent=1 // pred_fallthru
      _
    // Predicated region
    $region46: #{tpu_custom_call.1} parent=1 // pred_check
      _
    $region47: #{tpu_custom_call.1} parent=1 // pred_check_branch
      %83 = sbr.rel (0) target = $region49
    $region48: #{tpu_custom_call.1} parent=1 // pred_region
      %84 = dma.done [#allocation3], 256
    $region49: #{tpu_custom_call.1} parent=1 // pred_fallthru
      _
    // Predicated region
    $region50: #{tpu_custom_call.1} parent=1 // pred_check
      _
    $region51: #{tpu_custom_call.1} parent=1 // pred_check_branch
      %86 = sbr.rel (0) target = $region53
    $region52: #{tpu_custom_call.1} parent=1 // pred_region
      %87 = dma.done [#allocation6], 1024
    $region53: #{tpu_custom_call.1} parent=1 // pred_fallthru
      _
    // Predicated region
    $region54: #{tpu_custom_call.1} parent=1 // pred_check
      _
    $region55: #{tpu_custom_call.1} parent=1 // pred_check_branch
      %89 = sbr.rel (0) target = $region57
    $region56: #{tpu_custom_call.1} parent=1 // pred_region
      %90 = dma.done [#allocation6], 1024
    $region57: #{tpu_custom_call.1} parent=1 // pred_fallthru
      _
    // Predicated region
    $region58: #{tpu_custom_call.1} parent=1 // pred_check
      _
    $region59: #{tpu_custom_call.1} parent=1 // pred_check_branch
      %92 = sbr.rel (0) target = $region61
    $region60: #{tpu_custom_call.1} parent=1 // pred_region
      %93 = dma.done [#allocation9], 1024
    $region61: #{tpu_custom_call.1} parent=1 // pred_fallthru
      _
    %v95 = vld [vmem:[#allocation2] sm:$0xff]
    %v96 = vld [vmem:[#allocation2 + $0x8] sm:$0xff]
    %v97 = vld [vmem:[#allocation5] sm:$0xf]
    %v98 = vld [vmem:[#allocation5 + $0x4] sm:$0xf]
    %v99 = vld [vmem:[#allocation5 + $0x8] sm:$0xf]
    %v100 = vld [vmem:[#allocation5 + $0xc] sm:$0xf]
    %v101 = vld [vmem:[#allocation5 + $0x10] sm:$0xf]
    %v102 = vld [vmem:[#allocation5 + $0x14] sm:$0xf]
    %v103 = vld [vmem:[#allocation5 + $0x18] sm:$0xf]
    %v104 = vld [vmem:[#allocation5 + $0x1c] sm:$0xf]
    %v105 = vld [vmem:[#allocation5 + $0x20] sm:$0xf]
    %v106 = vld [vmem:[#allocation5 + $0x24] sm:$0xf]
    %v107 = vld [vmem:[#allocation5 + $0x28] sm:$0xf]
    %v108 = vld [vmem:[#allocation5 + $0x2c] sm:$0xf]
    %v109 = vld [vmem:[#allocation5 + $0x30] sm:$0xf]
    %v110 = vld [vmem:[#allocation5 + $0x34] sm:$0xf]
    %v111 = vld [vmem:[#allocation5 + $0x38] sm:$0xf]
    %v112 = vld [vmem:[#allocation5 + $0x3c] sm:$0xf]
    %v113 = vld [vmem:[%s2] sm:$0x1]
    %v114 = vpack.c.bf16 %v96, %v95
    %v116 = vlaneseq
    %v117 = vshrl.u32 %v116, 7
    %v118 = vsub.s32 0, %v117
    %v119 = vrot.slane %v113, %v118
    %v137 = vunpack.c.l.b16 %v97
    %v138 = vunpack.c.l.b16 %v98
    %v139 = vunpack.c.l.b16 %v99
    %v140 = vunpack.c.l.b16 %v100
    %v141 = vunpack.c.l.b16 %v101
    %v142 = vunpack.c.l.b16 %v102
    %v143 = vunpack.c.l.b16 %v103
    %v144 = vunpack.c.l.b16 %v104
    %v145 = vunpack.c.l.b16 %v105
    %v146 = vunpack.c.l.b16 %v106
    %v147 = vunpack.c.l.b16 %v107
    %v148 = vunpack.c.l.b16 %v108
    %v149 = vunpack.c.l.b16 %v109
    %v150 = vunpack.c.l.b16 %v110
    %v151 = vunpack.c.l.b16 %v111
    %v152 = vunpack.c.l.b16 %v112
    %v153 = vpack.c.b16 %v138, %v137
    %v154 = vpack.c.b16 %v140, %v139
    %v155 = vpack.c.b16 %v142, %v141
    %v156 = vpack.c.b16 %v144, %v143
    %v157 = vpack.c.b16 %v146, %v145
    %v158 = vpack.c.b16 %v148, %v147
    %v159 = vpack.c.b16 %v150, %v149
    %v160 = vpack.c.b16 %v152, %v151
    %169 = vmatprep.subr.bf16.mxu0 0
    %170 = vmatpush1.bf16.msra.mxu0 %v160
    %171 = vmatprep.subr.bf16.mxu0 0
    %172 = vmatpush1.bf16.msra.mxu0 %v159
    %173 = vmatprep.subr.bf16.mxu0 0
    %174 = vmatpush1.bf16.msra.mxu0 %v158
    %175 = vmatprep.subr.bf16.mxu0 0
    %176 = vmatpush1.bf16.msra.mxu0 %v157
    %177 = vmatprep.subr.bf16.mxu0 0
    %178 = vmatpush1.bf16.msra.mxu0 %v156
    %179 = vmatprep.subr.bf16.mxu0 0
    %180 = vmatpush1.bf16.msra.mxu0 %v155
    %181 = vmatprep.subr.bf16.mxu0 0
    %182 = vmatpush1.bf16.msra.mxu0 %v154
    %183 = vmatprep.subr.bf16.mxu0 0
    %184 = vmatpush1.bf16.msra.mxu0 %v153
    %185 = vmatprep.subr.bf16.mxu0 0
    %186 = vmatpush2.bf16.msra.mxu0 0
    %187 = vmatprep.subr.bf16.mxu0 0
    %188 = vmatpush2.bf16.msra.mxu0 0
    %189 = vmatprep.subr.bf16.mxu0 0
    %190 = vmatpush2.bf16.msra.mxu0 0
    %191 = vmatprep.subr.bf16.mxu0 0
    %192 = vmatpush2.bf16.msra.mxu0 0
    %193 = vmatprep.subr.bf16.mxu0 0
    %194 = vmatpush2.bf16.msra.mxu0 0
    %195 = vmatprep.subr.bf16.mxu0 0
    %196 = vmatpush2.bf16.msra.mxu0 0
    %197 = vmatprep.subr.bf16.mxu0 0
    %198 = vmatpush2.bf16.msra.mxu0 0
    %199 = vmatprep.subr.bf16.mxu0 0
    %200 = vmatpush2.bf16.msra.mxu0 0
    %201 = vmatprep.mubr.bf16.mxu0 0
    %202 = vmatmul.mubr.bf16.gmra.mxu0 %v114
    %v203 = vpop.f32.mrf.mxu0
    %v204 = vadd.f32 %v119, %v203
    %v205 = vpop.f32.mrf.mxu0
    %v206 = vpop.f32.mrf.mxu0
    %v207 = vadd.f32 %v119, %v206
    %v208 = vpop.f32.mrf.mxu0
    %209 = vdwg.mxu0
    %v210 = vmax.f32 %v204, 0.0
    %v211 = vmax.f32 %v207, 0.0
    %v212 = vld [vmem:[%s3] sm:$0x1]
    %v213 = vld [vmem:[%s4] sm:$0x1]
    %214 = vadd.xlane.f32.xlu0 %v210
    %v215 = vpop.xlane.xlu0 %214
    %216 = vadd.xlane.f32.xlu0 %v211
    %v217 = vpop.xlane.xlu0 %216
    %v218 = vmul.f32 %v210, %v210
    %v219 = vmul.f32 %v211, %v211
    %220 = vadd.xlane.f32.xlu0 %v218
    %v221 = vpop.xlane.xlu0 %220
    %222 = vadd.xlane.f32.xlu0 %v219
    %v223 = vpop.xlane.xlu0 %222
    %v224 = vmul.f32 %v215, 0.03125
    %v225 = vmul.f32 %v217, 0.03125
    %v226 = vmul.f32 %v221, 0.03125
    %v227 = vmul.f32 %v223, 0.03125
    %v228 = vmul.f32 %v224, %v224
    %v229 = vmul.f32 %v225, %v225
    %v230 = vsub.f32 %v226, %v228
    %v231 = vsub.f32 %v227, %v229
    %v232 = vmax.f32 %v230, 0.0
    %v233 = vmax.f32 %v231, 0.0
    %v234 = vsub.f32 %v210, %v224
    %v235 = vsub.f32 %v211, %v225
    %v236 = vadd.f32 %v232, 1e-05
    %v237 = vadd.f32 %v233, 1e-05
    %v238 = vrsqrt.pop %v236
    %v239 = vrsqrt.pop %v237
    %v240 = vmul.f32 %v234, %v238
    %v241 = vmul.f32 %v235, %v239
    %v243 = vlaneseq
    %v244 = vshrl.u32 %v243, 7
    %v245 = vsub.s32 0, %v244
    %v246 = vrot.slane %v212, %v245
    %v248 = vmul.f32 %v240, %v246
    %v249 = vmul.f32 %v241, %v246
    %v251 = vlaneseq
    %v252 = vshrl.u32 %v251, 7
    %v253 = vsub.s32 0, %v252
    %v254 = vrot.slane %v213, %v253
    %v256 = vadd.f32 %v248, %v254
    %v257 = vadd.f32 %v249, %v254
    %v258 = vld [vmem:[#allocation7] sm:$0xf]
    %v259 = vld [vmem:[#allocation7 + $0x4] sm:$0xf]
    %v260 = vld [vmem:[#allocation7 + $0x8] sm:$0xf]
    %v261 = vld [vmem:[#allocation7 + $0xc] sm:$0xf]
    %v262 = vld [vmem:[#allocation7 + $0x10] sm:$0xf]
    %v263 = vld [vmem:[#allocation7 + $0x14] sm:$0xf]
    %v264 = vld [vmem:[#allocation7 + $0x18] sm:$0xf]
    %v265 = vld [vmem:[#allocation7 + $0x1c] sm:$0xf]
    %v266 = vld [vmem:[#allocation7 + $0x20] sm:$0xf]
    %v267 = vld [vmem:[#allocation7 + $0x24] sm:$0xf]
    %v268 = vld [vmem:[#allocation7 + $0x28] sm:$0xf]
    %v269 = vld [vmem:[#allocation7 + $0x2c] sm:$0xf]
    %v270 = vld [vmem:[#allocation7 + $0x30] sm:$0xf]
    %v271 = vld [vmem:[#allocation7 + $0x34] sm:$0xf]
    %v272 = vld [vmem:[#allocation7 + $0x38] sm:$0xf]
    %v273 = vld [vmem:[#allocation7 + $0x3c] sm:$0xf]
    %v274 = vld [vmem:[%s6] sm:$0x1]
    %v275 = vpack.c.bf16 %v257, %v256
    %v277 = vlaneseq
    %v278 = vshrl.u32 %v277, 7
    %v279 = vsub.s32 0, %v278
    %v280 = vrot.slane %v274, %v279
    %v298 = vunpack.c.l.b16 %v258
    %v299 = vunpack.c.l.b16 %v259
    %v300 = vunpack.c.l.b16 %v260
    %v301 = vunpack.c.l.b16 %v261
    %v302 = vunpack.c.l.b16 %v262
    %v303 = vunpack.c.l.b16 %v263
    %v304 = vunpack.c.l.b16 %v264
    %v305 = vunpack.c.l.b16 %v265
    %v306 = vunpack.c.l.b16 %v266
    %v307 = vunpack.c.l.b16 %v267
    %v308 = vunpack.c.l.b16 %v268
    %v309 = vunpack.c.l.b16 %v269
    %v310 = vunpack.c.l.b16 %v270
    %v311 = vunpack.c.l.b16 %v271
    %v312 = vunpack.c.l.b16 %v272
    %v313 = vunpack.c.l.b16 %v273
    %v314 = vpack.c.b16 %v299, %v298
    %v315 = vpack.c.b16 %v301, %v300
    %v316 = vpack.c.b16 %v303, %v302
    %v317 = vpack.c.b16 %v305, %v304
    %v318 = vpack.c.b16 %v307, %v306
    %v319 = vpack.c.b16 %v309, %v308
    %v320 = vpack.c.b16 %v311, %v310
    %v321 = vpack.c.b16 %v313, %v312
    %330 = vmatprep.subr.bf16.mxu0 0
    %331 = vmatpush1.bf16.msra.mxu0 %v321
    %332 = vmatprep.subr.bf16.mxu0 0
    %333 = vmatpush1.bf16.msra.mxu0 %v320
    %334 = vmatprep.subr.bf16.mxu0 0
    %335 = vmatpush1.bf16.msra.mxu0 %v319
    %336 = vmatprep.subr.bf16.mxu0 0
    %337 = vmatpush1.bf16.msra.mxu0 %v318
    %338 = vmatprep.subr.bf16.mxu0 0
    %339 = vmatpush1.bf16.msra.mxu0 %v317
    %340 = vmatprep.subr.bf16.mxu0 0
    %341 = vmatpush1.bf16.msra.mxu0 %v316
    %342 = vmatprep.subr.bf16.mxu0 0
    %343 = vmatpush1.bf16.msra.mxu0 %v315
    %344 = vmatprep.subr.bf16.mxu0 0
    %345 = vmatpush1.bf16.msra.mxu0 %v314
    %346 = vmatprep.subr.bf16.mxu0 0
    %347 = vmatpush2.bf16.msra.mxu0 0
    %348 = vmatprep.subr.bf16.mxu0 0
    %349 = vmatpush2.bf16.msra.mxu0 0
    %350 = vmatprep.subr.bf16.mxu0 0
    %351 = vmatpush2.bf16.msra.mxu0 0
    %352 = vmatprep.subr.bf16.mxu0 0
    %353 = vmatpush2.bf16.msra.mxu0 0
    %354 = vmatprep.subr.bf16.mxu0 0
    %355 = vmatpush2.bf16.msra.mxu0 0
    %356 = vmatprep.subr.bf16.mxu0 0
    %357 = vmatpush2.bf16.msra.mxu0 0
    %358 = vmatprep.subr.bf16.mxu0 0
    %359 = vmatpush2.bf16.msra.mxu0 0
    %360 = vmatprep.subr.bf16.mxu0 0
    %361 = vmatpush2.bf16.msra.mxu0 0
    %362 = vmatprep.mubr.bf16.mxu0 0
    %363 = vmatmul.mubr.bf16.gmra.mxu0 %v275
    %v364 = vpop.f32.mrf.mxu0
    %v365 = vadd.f32 %v280, %v364
    %v366 = vpop.f32.mrf.mxu0
    %v367 = vpop.f32.mrf.mxu0
    %v368 = vadd.f32 %v280, %v367
    %v369 = vpop.f32.mrf.mxu0
    %370 = vdwg.mxu0
    %v371 = vmax.f32 %v365, 0.0
    %v372 = vmax.f32 %v368, 0.0
    %v373 = vld [vmem:[%s7] sm:$0x1]
    %v374 = vld [vmem:[%s8] sm:$0x1]
    %375 = vadd.xlane.f32.xlu0 %v371
    %v376 = vpop.xlane.xlu0 %375
    %377 = vadd.xlane.f32.xlu0 %v372
    %v378 = vpop.xlane.xlu0 %377
    %v379 = vmul.f32 %v371, %v371
    %v380 = vmul.f32 %v372, %v372
    %381 = vadd.xlane.f32.xlu0 %v379
    %v382 = vpop.xlane.xlu0 %381
    %383 = vadd.xlane.f32.xlu0 %v380
    %v384 = vpop.xlane.xlu0 %383
    %v385 = vmul.f32 %v376, 0.03125
    %v386 = vmul.f32 %v378, 0.03125
    %v387 = vmul.f32 %v382, 0.03125
    %v388 = vmul.f32 %v384, 0.03125
    %v389 = vmul.f32 %v385, %v385
    %v390 = vmul.f32 %v386, %v386
    %v391 = vsub.f32 %v387, %v389
    %v392 = vsub.f32 %v388, %v390
    %v393 = vmax.f32 %v391, 0.0
    %v394 = vmax.f32 %v392, 0.0
    %v395 = vsub.f32 %v371, %v385
    %v396 = vsub.f32 %v372, %v386
    %v397 = vadd.f32 %v393, 1e-05
    %v398 = vadd.f32 %v394, 1e-05
    %v399 = vrsqrt.pop %v397
    %v400 = vrsqrt.pop %v398
    %v401 = vmul.f32 %v395, %v399
    %v402 = vmul.f32 %v396, %v400
    %v404 = vlaneseq
    %v405 = vshrl.u32 %v404, 7
    %v406 = vsub.s32 0, %v405
    %v407 = vrot.slane %v373, %v406
    %v409 = vmul.f32 %v401, %v407
    %v410 = vmul.f32 %v402, %v407
    %v412 = vlaneseq
    %v413 = vshrl.u32 %v412, 7
    %v414 = vsub.s32 0, %v413
    %v415 = vrot.slane %v374, %v414
    %v417 = vadd.f32 %v409, %v415
    %v418 = vadd.f32 %v410, %v415
    %v419 = vld [vmem:[#allocation8] sm:$0xf]
    %v420 = vld [vmem:[#allocation8 + $0x4] sm:$0xf]
    %v421 = vld [vmem:[#allocation8 + $0x8] sm:$0xf]
    %v422 = vld [vmem:[#allocation8 + $0xc] sm:$0xf]
    %v423 = vld [vmem:[#allocation8 + $0x10] sm:$0xf]
    %v424 = vld [vmem:[#allocation8 + $0x14] sm:$0xf]
    %v425 = vld [vmem:[#allocation8 + $0x18] sm:$0xf]
    %v426 = vld [vmem:[#allocation8 + $0x1c] sm:$0xf]
    %v427 = vld [vmem:[#allocation8 + $0x20] sm:$0xf]
    %v428 = vld [vmem:[#allocation8 + $0x24] sm:$0xf]
    %v429 = vld [vmem:[#allocation8 + $0x28] sm:$0xf]
    %v430 = vld [vmem:[#allocation8 + $0x2c] sm:$0xf]
    %v431 = vld [vmem:[#allocation8 + $0x30] sm:$0xf]
    %v432 = vld [vmem:[#allocation8 + $0x34] sm:$0xf]
    %v433 = vld [vmem:[#allocation8 + $0x38] sm:$0xf]
    %v434 = vld [vmem:[#allocation8 + $0x3c] sm:$0xf]
    %v435 = vld [vmem:[%s10] sm:$0x1]
    %v436 = vpack.c.bf16 %v418, %v417
    %v438 = vlaneseq
    %v439 = vshrl.u32 %v438, 7
    %v440 = vsub.s32 0, %v439
    %v441 = vrot.slane %v435, %v440
    %v459 = vunpack.c.l.b16 %v419
    %v460 = vunpack.c.l.b16 %v420
    %v461 = vunpack.c.l.b16 %v421
    %v462 = vunpack.c.l.b16 %v422
    %v463 = vunpack.c.l.b16 %v423
    %v464 = vunpack.c.l.b16 %v424
    %v465 = vunpack.c.l.b16 %v425
    %v466 = vunpack.c.l.b16 %v426
    %v467 = vunpack.c.l.b16 %v427
    %v468 = vunpack.c.l.b16 %v428
    %v469 = vunpack.c.l.b16 %v429
    %v470 = vunpack.c.l.b16 %v430
    %v471 = vunpack.c.l.b16 %v431
    %v472 = vunpack.c.l.b16 %v432
    %v473 = vunpack.c.l.b16 %v433
    %v474 = vunpack.c.l.b16 %v434
    %v475 = vpack.c.b16 %v460, %v459
    %v476 = vpack.c.b16 %v462, %v461
    %v477 = vpack.c.b16 %v464, %v463
    %v478 = vpack.c.b16 %v466, %v465
    %v479 = vpack.c.b16 %v468, %v467
    %v480 = vpack.c.b16 %v470, %v469
    %v481 = vpack.c.b16 %v472, %v471
    %v482 = vpack.c.b16 %v474, %v473
    %491 = vmatprep.subr.bf16.mxu0 0
    %492 = vmatpush1.bf16.msra.mxu0 %v482
    %493 = vmatprep.subr.bf16.mxu0 0
    %494 = vmatpush1.bf16.msra.mxu0 %v481
    %495 = vmatprep.subr.bf16.mxu0 0
    %496 = vmatpush1.bf16.msra.mxu0 %v480
    %497 = vmatprep.subr.bf16.mxu0 0
    %498 = vmatpush1.bf16.msra.mxu0 %v479
    %499 = vmatprep.subr.bf16.mxu0 0
    %500 = vmatpush1.bf16.msra.mxu0 %v478
    %501 = vmatprep.subr.bf16.mxu0 0
    %502 = vmatpush1.bf16.msra.mxu0 %v477
    %503 = vmatprep.subr.bf16.mxu0 0
    %504 = vmatpush1.bf16.msra.mxu0 %v476
    %505 = vmatprep.subr.bf16.mxu0 0
    %506 = vmatpush1.bf16.msra.mxu0 %v475
    %507 = vmatprep.subr.bf16.mxu0 0
    %508 = vmatpush2.bf16.msra.mxu0 0
    %509 = vmatprep.subr.bf16.mxu0 0
    %510 = vmatpush2.bf16.msra.mxu0 0
    %511 = vmatprep.subr.bf16.mxu0 0
    %512 = vmatpush2.bf16.msra.mxu0 0
    %513 = vmatprep.subr.bf16.mxu0 0
    %514 = vmatpush2.bf16.msra.mxu0 0
    %515 = vmatprep.subr.bf16.mxu0 0
    %516 = vmatpush2.bf16.msra.mxu0 0
    %517 = vmatprep.subr.bf16.mxu0 0
    %518 = vmatpush2.bf16.msra.mxu0 0
    %519 = vmatprep.subr.bf16.mxu0 0
    %520 = vmatpush2.bf16.msra.mxu0 0
    %521 = vmatprep.subr.bf16.mxu0 0
    %522 = vmatpush2.bf16.msra.mxu0 0
    %523 = vmatprep.mubr.bf16.mxu0 0
    %524 = vmatmul.mubr.bf16.gmra.mxu0 %v436
    %v525 = vpop.f32.mrf.mxu0
    %v526 = vadd.f32 %v441, %v525
    %v527 = vpop.f32.mrf.mxu0
    %v528 = vpop.f32.mrf.mxu0
    %v529 = vadd.f32 %v441, %v528
    %v530 = vpop.f32.mrf.mxu0
    %531 = vdwg.mxu0
    %532 = vst [vmem:[#allocation10] sm:$0xff] %v526
    %533 = vst [vmem:[#allocation10 + $0x8] sm:$0xff] %v529
    // Predicated region
    $region62: #{tpu_custom_call.1} parent=1 // pred_check
      _
    $region63: #{tpu_custom_call.1} parent=1 // pred_check_branch
      %535 = sbr.rel (0) target = $region65
    $region64: #{tpu_custom_call.1} parent=1 // pred_region
      %s537 = ssub.s32 256, 256
      %538 = vsyncadd [#allocation4], %s537
      %s539 = sshll.u32 [#allocation10], 4
      %s540 = int_to_ptr.vmem [resolvable:$true] %s539
      %545 = dma.vmem_to_hbm [thread:$0]  %s540, 256, %s11, [#allocation4], 128, 128, 8
    $region65: #{tpu_custom_call.1} parent=1 // pred_fallthru
      _
    // Predicated region
    $region66: #{tpu_custom_call.1} parent=1 // pred_check
      _
    $region67: #{tpu_custom_call.1} parent=1 // pred_check_branch
      %547 = sbr.rel (0) target = $region69
    $region68: #{tpu_custom_call.1} parent=1 // pred_region
      %548 = dma.done [#allocation4], 256
    $region69: #{tpu_custom_call.1} parent=1 // pred_fallthru
      _
    %549 = vsyncpa [#allocation3], 1
    %550 = vsyncpa [#allocation6], 1
    %551 = vsyncpa [#allocation9], 1
    %552 = vsyncpa [#allocation4], 1

// kernel: tpu_custom_call.1
$region0: #{tpu_custom_call.1}
  #allocation0 [shape = 'u32[]', space=smem, size = 0x4, offset = 0x4, fixed_abs, tag = 'smem constant byte address 0x4 - core index']
  #allocation1 [shape = 'u32[144,128]{1,0:T(1,128)}', space=vmem, size = 0x12000, scoped, tag = 'internal scratch']
  %s0 = inlined_call_operand.hbm [shape: f32[16,128], index: 0, kind: input, shape index: {}]
  %s1 = inlined_call_operand.hbm [shape: bf16[128,128], index: 1, kind: input, shape index: {}]
  %s2 = inlined_call_operand.vmem [shape: f32[1,128], index: 2, kind: input, shape index: {}]
  %s3 = inlined_call_operand.vmem [shape: f32[1,128], index: 3, kind: input, shape index: {}]
  %s4 = inlined_call_operand.vmem [shape: f32[1,128], index: 4, kind: input, shape index: {}]
  %s5 = inlined_call_operand.hbm [shape: bf16[128,128], index: 5, kind: input, shape index: {}]
  %s6 = inlined_call_operand.vmem [shape: f32[1,128], index: 6, kind: input, shape index: {}]
  %s7 = inlined_call_operand.vmem [shape: f32[1,128], index: 7, kind: input, shape index: {}]
  %s8 = inlined_call_operand.vmem [shape: f32[1,128], index: 8, kind: input, shape index: {}]
  %s9 = inlined_call_operand.hbm [shape: bf16[128,128], index: 9, kind: input, shape index: {}]
  %s10 = inlined_call_operand.vmem [shape: f32[1,128], index: 10, kind: input, shape index: {}]
  %s11 = inlined_call_operand.hbm [shape: f32[16,128], index: 11, kind: output, shape index: {}]
  %s12 = sld [smem:[#allocation0]]
  $region70: #{tpu_custom_call.1} parent=0
    _
  %s14 = ssub.s32 1, %s12
  %s15 = scalar_select 0, %s14, %s12
  $region1: #{tpu_custom_call.1} parent=0
    #allocation2 [shape = 'u8[8192]{0}', space=vmem, size = 0x2000, scoped, tag = 'input window, operand 0, single buffered']
    #allocation3 [shape = 's32[1]{0}', space=sflag, size = 0x4, scoped, tag = 'scoped memory for tpu_custom_call.1']
    #allocation4 [shape = 's32[1]{0}', space=sflag, size = 0x4, scoped, tag = 'scoped memory for tpu_custom_call.1']
    #allocation5 [shape = 'u8[32768]{0}', space=vmem, size = 0x8000, scoped, tag = 'input window, operand 1, single buffered']
    #allocation6 [shape = 's32[1]{0}', space=sflag, size = 0x4, scoped, tag = 'scoped memory for tpu_custom_call.1']
    #allocation7 [shape = 'u8[32768]{0}', space=vmem, size = 0x8000, scoped, tag = 'input window, operand 5, single buffered']
    #allocation8 [shape = 'u8[32768]{0}', space=vmem, size = 0x8000, scoped, tag = 'input window, operand 9, single buffered']
    #allocation9 [shape = 's32[1]{0}', space=sflag, size = 0x4, scoped, tag = 'scoped memory for tpu_custom_call.1']
    #allocation10 [shape = 'u8[8192]{0}', space=vmem, size = 0x2000, scoped, tag = 'output window, operand 0, single buffered']
    %16 = vsyncpa [#allocation3], 0
    %17 = vsyncpa [#allocation6], 0
    %18 = vsyncpa [#allocation9], 0
    %19 = vsyncpa [#allocation4], 0
    // Predicated region
    $region2: #{tpu_custom_call.1} parent=1 // pred_check
      _
    $region3: #{tpu_custom_call.1} parent=1 // pred_check_branch
      %21 = sbr.rel (0) target = $region5
    $region4: #{tpu_custom_call.1} parent=1 // pred_region
      %s23 = ssub.s32 256, 256
      %24 = vsyncadd [#allocation3], %s23
      %s25 = sshll.u32 [#allocation2], 4
      %s26 = int_to_ptr.vmem [resolvable:$true] %s25
      %31 = dma.hbm_to_vmem [thread:$0]  %s0, 256, %s26, [#allocation3], 128, 128, 8
    $region5: #{tpu_custom_call.1} parent=1 // pred_fallthru
      _
    // Predicated region
    $region6: #{tpu_custom_call.1} parent=1 // pred_check
      _
    $region7: #{tpu_custom_call.1} parent=1 // pred_check_branch
      %33 = sbr.rel (0) target = $region9
    $region8: #{tpu_custom_call.1} parent=1 // pred_region
      %s35 = ssub.s32 1024, 1024
      %36 = vsyncadd [#allocation6], %s35
      %s37 = sshll.u32 [#allocation5], 4
      %s38 = int_to_ptr.vmem [resolvable:$true] %s37
      %43 = dma.hbm_to_vmem [thread:$0]  %s1, 1024, %s38, [#allocation6], 64, 64, 4
    $region9: #{tpu_custom_call.1} parent=1 // pred_fallthru
      _
    // Predicated region
    $region10: #{tpu_custom_call.1} parent=1 // pred_check
      _
    $region11: #{tpu_custom_call.1} parent=1 // pred_check_branch
      %45 = sbr.rel (0) target = $region13
    $region12: #{tpu_custom_call.1} parent=1 // pred_region
      _
    $region13: #{tpu_custom_call.1} parent=1 // pred_fallthru
      _
    // Predicated region
    $region14: #{tpu_custom_call.1} parent=1 // pred_check
      _
    $region15: #{tpu_custom_call.1} parent=1 // pred_check_branch
      %47 = sbr.rel (0) target = $region17
    $region16: #{tpu_custom_call.1} parent=1 // pred_region
      _
    $region17: #{tpu_custom_call.1} parent=1 // pred_fallthru
      _
    // Predicated region
    $region18: #{tpu_custom_call.1} parent=1 // pred_check
      _
    $region19: #{tpu_custom_call.1} parent=1 // pred_check_branch
      %49 = sbr.rel (0) target = $region21
    $region20: #{tpu_custom_call.1} parent=1 // pred_region
      _
    $region21: #{tpu_custom_call.1} parent=1 // pred_fallthru
      _
    // Predicated region
    $region22: #{tpu_custom_call.1} parent=1 // pred_check
      _
    $region23: #{tpu_custom_call.1} parent=1 // pred_check_branch
      %51 = sbr.rel (0) target = $region25
    $region24: #{tpu_custom_call.1} parent=1 // pred_region
      %s53 = ssub.s32 1024, 1024
      %54 = vsyncadd [#allocation6], %s53
      %s55 = sshll.u32 [#allocation7], 4
      %s56 = int_to_ptr.vmem [resolvable:$true] %s55
      %61 = dma.hbm_to_vmem [thread:$0]  %s5, 1024, %s56, [#allocation6], 64, 64, 4
    $region25: #{tpu_custom_call.1} parent=1 // pred_fallthru
      _
    // Predicated region
    $region26: #{tpu_custom_call.1} parent=1 // pred_check
      _
    $region27: #{tpu_custom_call.1} parent=1 // pred_check_branch
      %63 = sbr.rel (0) target = $region29
    $region28: #{tpu_custom_call.1} parent=1 // pred_region
      _
    $region29: #{tpu_custom_call.1} parent=1 // pred_fallthru
      _
    // Predicated region
    $region30: #{tpu_custom_call.1} parent=1 // pred_check
      _
    $region31: #{tpu_custom_call.1} parent=1 // pred_check_branch
      %65 = sbr.rel (0) target = $region33
    $region32: #{tpu_custom_call.1} parent=1 // pred_region
      _
    $region33: #{tpu_custom_call.1} parent=1 // pred_fallthru
      _
    // Predicated region
    $region34: #{tpu_custom_call.1} parent=1 // pred_check
      _
    $region35: #{tpu_custom_call.1} parent=1 // pred_check_branch
      %67 = sbr.rel (0) target = $region37
    $region36: #{tpu_custom_call.1} parent=1 // pred_region
      _
    $region37: #{tpu_custom_call.1} parent=1 // pred_fallthru
      _
    // Predicated region
    $region38: #{tpu_custom_call.1} parent=1 // pred_check
      _
    $region39: #{tpu_custom_call.1} parent=1 // pred_check_branch
      %69 = sbr.rel (0) target = $region41
    $region40: #{tpu_custom_call.1} parent=1 // pred_region
      %s71 = ssub.s32 1024, 1024
      %72 = vsyncadd [#allocation9], %s71
      %s73 = sshll.u32 [#allocation8], 4
      %s74 = int_to_ptr.vmem [resolvable:$true] %s73
      %79 = dma.hbm_to_vmem [thread:$0]  %s9, 1024, %s74, [#allocation9], 64, 64, 4
    $region41: #{tpu_custom_call.1} parent=1 // pred_fallthru
      _
    // Predicated region
    $region42: #{tpu_custom_call.1} parent=1 // pred_check
      _
    $region43: #{tpu_custom_call.1} parent=1 // pred_check_branch
      %81 = sbr.rel (0) target = $region45
    $region44: #{tpu_custom_call.1} parent=1 // pred_region
      _
    $region45: #{tpu_custom_call.1} parent=1 // pred_fallthru
      _
    // Predicated region
    $region46: #{tpu_custom_call.1} parent=1 // pred_check
      _
    $region47: #{tpu_custom_call.1} parent=1 // pred_check_branch
      %83 = sbr.rel (0) target = $region49
    $region48: #{tpu_custom_call.1} parent=1 // pred_region
      %84 = dma.done [#allocation3], 256
    $region49: #{tpu_custom_call.1} parent=1 // pred_fallthru
      _
    // Predicated region
    $region50: #{tpu_custom_call.1} parent=1 // pred_check
      _
    $region51: #{tpu_custom_call.1} parent=1 // pred_check_branch
      %86 = sbr.rel (0) target = $region53
    $region52: #{tpu_custom_call.1} parent=1 // pred_region
      %87 = dma.done [#allocation6], 1024
    $region53: #{tpu_custom_call.1} parent=1 // pred_fallthru
      _
    // Predicated region
    $region54: #{tpu_custom_call.1} parent=1 // pred_check
      _
    $region55: #{tpu_custom_call.1} parent=1 // pred_check_branch
      %89 = sbr.rel (0) target = $region57
    $region56: #{tpu_custom_call.1} parent=1 // pred_region
      %90 = dma.done [#allocation6], 1024
    $region57: #{tpu_custom_call.1} parent=1 // pred_fallthru
      _
    // Predicated region
    $region58: #{tpu_custom_call.1} parent=1 // pred_check
      _
    $region59: #{tpu_custom_call.1} parent=1 // pred_check_branch
      %92 = sbr.rel (0) target = $region61
    $region60: #{tpu_custom_call.1} parent=1 // pred_region
      %93 = dma.done [#allocation9], 1024
    $region61: #{tpu_custom_call.1} parent=1 // pred_fallthru
      _
    %v95 = vld [vmem:[#allocation2] sm:$0xff]
    %v96 = vld [vmem:[#allocation2 + $0x8] sm:$0xff]
    %v97 = vld [vmem:[#allocation5] sm:$0xf]
    %v98 = vld [vmem:[#allocation5 + $0x4] sm:$0xf]
    %v99 = vld [vmem:[#allocation5 + $0x8] sm:$0xf]
    %v100 = vld [vmem:[#allocation5 + $0xc] sm:$0xf]
    %v101 = vld [vmem:[#allocation5 + $0x10] sm:$0xf]
    %v102 = vld [vmem:[#allocation5 + $0x14] sm:$0xf]
    %v103 = vld [vmem:[#allocation5 + $0x18] sm:$0xf]
    %v104 = vld [vmem:[#allocation5 + $0x1c] sm:$0xf]
    %v105 = vld [vmem:[#allocation5 + $0x20] sm:$0xf]
    %v106 = vld [vmem:[#allocation5 + $0x24] sm:$0xf]
    %v107 = vld [vmem:[#allocation5 + $0x28] sm:$0xf]
    %v108 = vld [vmem:[#allocation5 + $0x2c] sm:$0xf]
    %v109 = vld [vmem:[#allocation5 + $0x30] sm:$0xf]
    %v110 = vld [vmem:[#allocation5 + $0x34] sm:$0xf]
    %v111 = vld [vmem:[#allocation5 + $0x38] sm:$0xf]
    %v112 = vld [vmem:[#allocation5 + $0x3c] sm:$0xf]
    %v113 = vld [vmem:[%s2] sm:$0x1]
    %v114 = vpack.c.bf16 %v96, %v95
    %v116 = vlaneseq
    %v117 = vshrl.u32 %v116, 7
    %v118 = vsub.s32 0, %v117
    %v119 = vrot.slane %v113, %v118
    %v137 = vunpack.c.l.b16 %v97
    %v138 = vunpack.c.l.b16 %v98
    %v139 = vunpack.c.l.b16 %v99
    %v140 = vunpack.c.l.b16 %v100
    %v141 = vunpack.c.l.b16 %v101
    %v142 = vunpack.c.l.b16 %v102
    %v143 = vunpack.c.l.b16 %v103
    %v144 = vunpack.c.l.b16 %v104
    %v145 = vunpack.c.l.b16 %v105
    %v146 = vunpack.c.l.b16 %v106
    %v147 = vunpack.c.l.b16 %v107
    %v148 = vunpack.c.l.b16 %v108
    %v149 = vunpack.c.l.b16 %v109
    %v150 = vunpack.c.l.b16 %v110
    %v151 = vunpack.c.l.b16 %v111
    %v152 = vunpack.c.l.b16 %v112
    %v153 = vpack.c.b16 %v138, %v137
    %v154 = vpack.c.b16 %v140, %v139
    %v155 = vpack.c.b16 %v142, %v141
    %v156 = vpack.c.b16 %v144, %v143
    %v157 = vpack.c.b16 %v146, %v145
    %v158 = vpack.c.b16 %v148, %v147
    %v159 = vpack.c.b16 %v150, %v149
    %v160 = vpack.c.b16 %v152, %v151
    %169 = vmatprep.subr.bf16.mxu0 0
    %170 = vmatpush1.bf16.msra.mxu0 %v160
    %171 = vmatprep.subr.bf16.mxu0 0
    %172 = vmatpush1.bf16.msra.mxu0 %v159
    %173 = vmatprep.subr.bf16.mxu0 0
    %174 = vmatpush1.bf16.msra.mxu0 %v158
    %175 = vmatprep.subr.bf16.mxu0 0
    %176 = vmatpush1.bf16.msra.mxu0 %v157
    %177 = vmatprep.subr.bf16.mxu0 0
    %178 = vmatpush1.bf16.msra.mxu0 %v156
    %179 = vmatprep.subr.bf16.mxu0 0
    %180 = vmatpush1.bf16.msra.mxu0 %v155
    %181 = vmatprep.subr.bf16.mxu0 0
    %182 = vmatpush1.bf16.msra.mxu0 %v154
    %183 = vmatprep.subr.bf16.mxu0 0
    %184 = vmatpush1.bf16.msra.mxu0 %v153
    %185 = vmatprep.subr.bf16.mxu0 0
    %186 = vmatpush2.bf16.msra.mxu0 0
    %187 = vmatprep.subr.bf16.mxu0 0
    %188 = vmatpush2.bf16.msra.mxu0 0
    %189 = vmatprep.subr.bf16.mxu0 0
    %190 = vmatpush2.bf16.msra.mxu0 0
    %191 = vmatprep.subr.bf16.mxu0 0
    %192 = vmatpush2.bf16.msra.mxu0 0
    %193 = vmatprep.subr.bf16.mxu0 0
    %194 = vmatpush2.bf16.msra.mxu0 0
    %195 = vmatprep.subr.bf16.mxu0 0
    %196 = vmatpush2.bf16.msra.mxu0 0
    %197 = vmatprep.subr.bf16.mxu0 0
    %198 = vmatpush2.bf16.msra.mxu0 0
    %199 = vmatprep.subr.bf16.mxu0 0
    %200 = vmatpush2.bf16.msra.mxu0 0
    %201 = vmatprep.mubr.bf16.mxu0 0
    %202 = vmatmul.mubr.bf16.gmra.mxu0 %v114
    %v203 = vpop.f32.mrf.mxu0
    %v204 = vadd.f32 %v119, %v203
    %v205 = vpop.f32.mrf.mxu0
    %v206 = vpop.f32.mrf.mxu0
    %v207 = vadd.f32 %v119, %v206
    %v208 = vpop.f32.mrf.mxu0
    %209 = vdwg.mxu0
    %v210 = vmax.f32 %v204, 0.0
    %v211 = vmax.f32 %v207, 0.0
    %v212 = vld [vmem:[%s3] sm:$0x1]
    %v213 = vld [vmem:[%s4] sm:$0x1]
    %214 = vadd.xlane.f32.xlu0 %v210
    %v215 = vpop.xlane.xlu0 %214
    %216 = vadd.xlane.f32.xlu0 %v211
    %v217 = vpop.xlane.xlu0 %216
    %v218 = vmul.f32 %v210, %v210
    %v219 = vmul.f32 %v211, %v211
    %220 = vadd.xlane.f32.xlu0 %v218
    %v221 = vpop.xlane.xlu0 %220
    %222 = vadd.xlane.f32.xlu0 %v219
    %v223 = vpop.xlane.xlu0 %222
    %v224 = vmul.f32 %v215, 0.03125
    %v225 = vmul.f32 %v217, 0.03125
    %v226 = vmul.f32 %v221, 0.03125
    %v227 = vmul.f32 %v223, 0.03125
    %v228 = vmul.f32 %v224, %v224
    %v229 = vmul.f32 %v225, %v225
    %v230 = vsub.f32 %v226, %v228
    %v231 = vsub.f32 %v227, %v229
    %v232 = vmax.f32 %v230, 0.0
    %v233 = vmax.f32 %v231, 0.0
    %v234 = vsub.f32 %v210, %v224
    %v235 = vsub.f32 %v211, %v225
    %v236 = vadd.f32 %v232, 1e-05
    %v237 = vadd.f32 %v233, 1e-05
    %v238 = vrsqrt.pop %v236
    %v239 = vrsqrt.pop %v237
    %v240 = vmul.f32 %v234, %v238
    %v241 = vmul.f32 %v235, %v239
    %v243 = vlaneseq
    %v244 = vshrl.u32 %v243, 7
    %v245 = vsub.s32 0, %v244
    %v246 = vrot.slane %v212, %v245
    %v248 = vmul.f32 %v240, %v246
    %v249 = vmul.f32 %v241, %v246
    %v251 = vlaneseq
    %v252 = vshrl.u32 %v251, 7
    %v253 = vsub.s32 0, %v252
    %v254 = vrot.slane %v213, %v253
    %v256 = vadd.f32 %v248, %v254
    %v257 = vadd.f32 %v249, %v254
    %v258 = vld [vmem:[#allocation7] sm:$0xf]
    %v259 = vld [vmem:[#allocation7 + $0x4] sm:$0xf]
    %v260 = vld [vmem:[#allocation7 + $0x8] sm:$0xf]
    %v261 = vld [vmem:[#allocation7 + $0xc] sm:$0xf]
    %v262 = vld [vmem:[#allocation7 + $0x10] sm:$0xf]
    %v263 = vld [vmem:[#allocation7 + $0x14] sm:$0xf]
    %v264 = vld [vmem:[#allocation7 + $0x18] sm:$0xf]
    %v265 = vld [vmem:[#allocation7 + $0x1c] sm:$0xf]
    %v266 = vld [vmem:[#allocation7 + $0x20] sm:$0xf]
    %v267 = vld [vmem:[#allocation7 + $0x24] sm:$0xf]
    %v268 = vld [vmem:[#allocation7 + $0x28] sm:$0xf]
    %v269 = vld [vmem:[#allocation7 + $0x2c] sm:$0xf]
    %v270 = vld [vmem:[#allocation7 + $0x30] sm:$0xf]
    %v271 = vld [vmem:[#allocation7 + $0x34] sm:$0xf]
    %v272 = vld [vmem:[#allocation7 + $0x38] sm:$0xf]
    %v273 = vld [vmem:[#allocation7 + $0x3c] sm:$0xf]
    %v274 = vld [vmem:[%s6] sm:$0x1]
    %v275 = vpack.c.bf16 %v257, %v256
    %v277 = vlaneseq
    %v278 = vshrl.u32 %v277, 7
    %v279 = vsub.s32 0, %v278
    %v280 = vrot.slane %v274, %v279
    %v298 = vunpack.c.l.b16 %v258
    %v299 = vunpack.c.l.b16 %v259
    %v300 = vunpack.c.l.b16 %v260
    %v301 = vunpack.c.l.b16 %v261
    %v302 = vunpack.c.l.b16 %v262
    %v303 = vunpack.c.l.b16 %v263
    %v304 = vunpack.c.l.b16 %v264
    %v305 = vunpack.c.l.b16 %v265
    %v306 = vunpack.c.l.b16 %v266
    %v307 = vunpack.c.l.b16 %v267
    %v308 = vunpack.c.l.b16 %v268
    %v309 = vunpack.c.l.b16 %v269
    %v310 = vunpack.c.l.b16 %v270
    %v311 = vunpack.c.l.b16 %v271
    %v312 = vunpack.c.l.b16 %v272
    %v313 = vunpack.c.l.b16 %v273
    %v314 = vpack.c.b16 %v299, %v298
    %v315 = vpack.c.b16 %v301, %v300
    %v316 = vpack.c.b16 %v303, %v302
    %v317 = vpack.c.b16 %v305, %v304
    %v318 = vpack.c.b16 %v307, %v306
    %v319 = vpack.c.b16 %v309, %v308
    %v320 = vpack.c.b16 %v311, %v310
    %v321 = vpack.c.b16 %v313, %v312
    %330 = vmatprep.subr.bf16.mxu0 0
    %331 = vmatpush1.bf16.msra.mxu0 %v321
    %332 = vmatprep.subr.bf16.mxu0 0
    %333 = vmatpush1.bf16.msra.mxu0 %v320
    %334 = vmatprep.subr.bf16.mxu0 0
    %335 = vmatpush1.bf16.msra.mxu0 %v319
    %336 = vmatprep.subr.bf16.mxu0 0
    %337 = vmatpush1.bf16.msra.mxu0 %v318
    %338 = vmatprep.subr.bf16.mxu0 0
    %339 = vmatpush1.bf16.msra.mxu0 %v317
    %340 = vmatprep.subr.bf16.mxu0 0
    %341 = vmatpush1.bf16.msra.mxu0 %v316
    %342 = vmatprep.subr.bf16.mxu0 0
    %343 = vmatpush1.bf16.msra.mxu0 %v315
    %344 = vmatprep.subr.bf16.mxu0 0
    %345 = vmatpush1.bf16.msra.mxu0 %v314
    %346 = vmatprep.subr.bf16.mxu0 0
    %347 = vmatpush2.bf16.msra.mxu0 0
    %348 = vmatprep.subr.bf16.mxu0 0
    %349 = vmatpush2.bf16.msra.mxu0 0
    %350 = vmatprep.subr.bf16.mxu0 0
    %351 = vmatpush2.bf16.msra.mxu0 0
    %352 = vmatprep.subr.bf16.mxu0 0
    %353 = vmatpush2.bf16.msra.mxu0 0
    %354 = vmatprep.subr.bf16.mxu0 0
    %355 = vmatpush2.bf16.msra.mxu0 0
    %356 = vmatprep.subr.bf16.mxu0 0
    %357 = vmatpush2.bf16.msra.mxu0 0
    %358 = vmatprep.subr.bf16.mxu0 0
    %359 = vmatpush2.bf16.msra.mxu0 0
    %360 = vmatprep.subr.bf16.mxu0 0
    %361 = vmatpush2.bf16.msra.mxu0 0
    %362 = vmatprep.mubr.bf16.mxu0 0
    %363 = vmatmul.mubr.bf16.gmra.mxu0 %v275
    %v364 = vpop.f32.mrf.mxu0
    %v365 = vadd.f32 %v280, %v364
    %v366 = vpop.f32.mrf.mxu0
    %v367 = vpop.f32.mrf.mxu0
    %v368 = vadd.f32 %v280, %v367
    %v369 = vpop.f32.mrf.mxu0
    %370 = vdwg.mxu0
    %v371 = vmax.f32 %v365, 0.0
    %v372 = vmax.f32 %v368, 0.0
    %v373 = vld [vmem:[%s7] sm:$0x1]
    %v374 = vld [vmem:[%s8] sm:$0x1]
    %375 = vadd.xlane.f32.xlu0 %v371
    %v376 = vpop.xlane.xlu0 %375
    %377 = vadd.xlane.f32.xlu0 %v372
    %v378 = vpop.xlane.xlu0 %377
    %v379 = vmul.f32 %v371, %v371
    %v380 = vmul.f32 %v372, %v372
    %381 = vadd.xlane.f32.xlu0 %v379
    %v382 = vpop.xlane.xlu0 %381
    %383 = vadd.xlane.f32.xlu0 %v380
    %v384 = vpop.xlane.xlu0 %383
    %v385 = vmul.f32 %v376, 0.03125
    %v386 = vmul.f32 %v378, 0.03125
    %v387 = vmul.f32 %v382, 0.03125
    %v388 = vmul.f32 %v384, 0.03125
    %v389 = vmul.f32 %v385, %v385
    %v390 = vmul.f32 %v386, %v386
    %v391 = vsub.f32 %v387, %v389
    %v392 = vsub.f32 %v388, %v390
    %v393 = vmax.f32 %v391, 0.0
    %v394 = vmax.f32 %v392, 0.0
    %v395 = vsub.f32 %v371, %v385
    %v396 = vsub.f32 %v372, %v386
    %v397 = vadd.f32 %v393, 1e-05
    %v398 = vadd.f32 %v394, 1e-05
    %v399 = vrsqrt.pop %v397
    %v400 = vrsqrt.pop %v398
    %v401 = vmul.f32 %v395, %v399
    %v402 = vmul.f32 %v396, %v400
    %v404 = vlaneseq
    %v405 = vshrl.u32 %v404, 7
    %v406 = vsub.s32 0, %v405
    %v407 = vrot.slane %v373, %v406
    %v409 = vmul.f32 %v401, %v407
    %v410 = vmul.f32 %v402, %v407
    %v412 = vlaneseq
    %v413 = vshrl.u32 %v412, 7
    %v414 = vsub.s32 0, %v413
    %v415 = vrot.slane %v374, %v414
    %v417 = vadd.f32 %v409, %v415
    %v418 = vadd.f32 %v410, %v415
    %v419 = vld [vmem:[#allocation8] sm:$0xf]
    %v420 = vld [vmem:[#allocation8 + $0x4] sm:$0xf]
    %v421 = vld [vmem:[#allocation8 + $0x8] sm:$0xf]
    %v422 = vld [vmem:[#allocation8 + $0xc] sm:$0xf]
    %v423 = vld [vmem:[#allocation8 + $0x10] sm:$0xf]
    %v424 = vld [vmem:[#allocation8 + $0x14] sm:$0xf]
    %v425 = vld [vmem:[#allocation8 + $0x18] sm:$0xf]
    %v426 = vld [vmem:[#allocation8 + $0x1c] sm:$0xf]
    %v427 = vld [vmem:[#allocation8 + $0x20] sm:$0xf]
    %v428 = vld [vmem:[#allocation8 + $0x24] sm:$0xf]
    %v429 = vld [vmem:[#allocation8 + $0x28] sm:$0xf]
    %v430 = vld [vmem:[#allocation8 + $0x2c] sm:$0xf]
    %v431 = vld [vmem:[#allocation8 + $0x30] sm:$0xf]
    %v432 = vld [vmem:[#allocation8 + $0x34] sm:$0xf]
    %v433 = vld [vmem:[#allocation8 + $0x38] sm:$0xf]
    %v434 = vld [vmem:[#allocation8 + $0x3c] sm:$0xf]
    %v435 = vld [vmem:[%s10] sm:$0x1]
    %v436 = vpack.c.bf16 %v418, %v417
    %v438 = vlaneseq
    %v439 = vshrl.u32 %v438, 7
    %v440 = vsub.s32 0, %v439
    %v441 = vrot.slane %v435, %v440
    %v459 = vunpack.c.l.b16 %v419
    %v460 = vunpack.c.l.b16 %v420
    %v461 = vunpack.c.l.b16 %v421
    %v462 = vunpack.c.l.b16 %v422
    %v463 = vunpack.c.l.b16 %v423
    %v464 = vunpack.c.l.b16 %v424
    %v465 = vunpack.c.l.b16 %v425
    %v466 = vunpack.c.l.b16 %v426
    %v467 = vunpack.c.l.b16 %v427
    %v468 = vunpack.c.l.b16 %v428
    %v469 = vunpack.c.l.b16 %v429
    %v470 = vunpack.c.l.b16 %v430
    %v471 = vunpack.c.l.b16 %v431
    %v472 = vunpack.c.l.b16 %v432
    %v473 = vunpack.c.l.b16 %v433
    %v474 = vunpack.c.l.b16 %v434
    %v475 = vpack.c.b16 %v460, %v459
    %v476 = vpack.c.b16 %v462, %v461
    %v477 = vpack.c.b16 %v464, %v463
    %v478 = vpack.c.b16 %v466, %v465
    %v479 = vpack.c.b16 %v468, %v467
    %v480 = vpack.c.b16 %v470, %v469
    %v481 = vpack.c.b16 %v472, %v471
    %v482 = vpack.c.b16 %v474, %v473
    %491 = vmatprep.subr.bf16.mxu0 0
    %492 = vmatpush1.bf16.msra.mxu0 %v482
    %493 = vmatprep.subr.bf16.mxu0 0
    %494 = vmatpush1.bf16.msra.mxu0 %v481
    %495 = vmatprep.subr.bf16.mxu0 0
    %496 = vmatpush1.bf16.msra.mxu0 %v480
    %497 = vmatprep.subr.bf16.mxu0 0
    %498 = vmatpush1.bf16.msra.mxu0 %v479
    %499 = vmatprep.subr.bf16.mxu0 0
    %500 = vmatpush1.bf16.msra.mxu0 %v478
    %501 = vmatprep.subr.bf16.mxu0 0
    %502 = vmatpush1.bf16.msra.mxu0 %v477
    %503 = vmatprep.subr.bf16.mxu0 0
    %504 = vmatpush1.bf16.msra.mxu0 %v476
    %505 = vmatprep.subr.bf16.mxu0 0
    %506 = vmatpush1.bf16.msra.mxu0 %v475
    %507 = vmatprep.subr.bf16.mxu0 0
    %508 = vmatpush2.bf16.msra.mxu0 0
    %509 = vmatprep.subr.bf16.mxu0 0
    %510 = vmatpush2.bf16.msra.mxu0 0
    %511 = vmatprep.subr.bf16.mxu0 0
    %512 = vmatpush2.bf16.msra.mxu0 0
    %513 = vmatprep.subr.bf16.mxu0 0
    %514 = vmatpush2.bf16.msra.mxu0 0
    %515 = vmatprep.subr.bf16.mxu0 0
    %516 = vmatpush2.bf16.msra.mxu0 0
    %517 = vmatprep.subr.bf16.mxu0 0
    %518 = vmatpush2.bf16.msra.mxu0 0
    %519 = vmatprep.subr.bf16.mxu0 0
    %520 = vmatpush2.bf16.msra.mxu0 0
    %521 = vmatprep.subr.bf16.mxu0 0
    %522 = vmatpush2.bf16.msra.mxu0 0
    %523 = vmatprep.mubr.bf16.mxu0 0
    %524 = vmatmul.mubr.bf16.gmra.mxu0 %v436
    %v525 = vpop.f32.mrf.mxu0
    %v526 = vadd.f32 %v441, %v525
    %v527 = vpop.f32.mrf.mxu0
    %v528 = vpop.f32.mrf.mxu0
    %v529 = vadd.f32 %v441, %v528
    %v530 = vpop.f32.mrf.mxu0
    %531 = vdwg.mxu0
    %532 = vst [vmem:[#allocation10] sm:$0xff] %v526
    %533 = vst [vmem:[#allocation10 + $0x8] sm:$0xff] %v529
    // Predicated region
    $region62: #{tpu_custom_call.1} parent=1 // pred_check
      _
    $region63: #{tpu_custom_call.1} parent=1 // pred_check_branch
      %535 = sbr.rel (0) target = $region65
    $region64: #{tpu_custom_call.1} parent=1 // pred_region
      %s537 = ssub.s32 256, 256
      %538 = vsyncadd [#allocation4], %s537
      %s539 = sshll.u32 [#allocation10], 4
      %s540 = int_to_ptr.vmem [resolvable:$true] %s539
      %545 = dma.vmem_to_hbm [thread:$0]  %s540, 256, %s11, [#allocation4], 128, 128, 8
    $region65: #{tpu_custom_call.1} parent=1 // pred_fallthru
      _
    // Predicated region
    $region66: #{tpu_custom_call.1} parent=1 // pred_check
      _
    $region67: #{tpu_custom_call.1} parent=1 // pred_check_branch
      %547 = sbr.rel (0) target = $region69
    $region68: #{tpu_custom_call.1} parent=1 // pred_region
      %548 = dma.done [#allocation4], 256
    $region69: #{tpu_custom_call.1} parent=1 // pred_fallthru
      _
    %549 = vsyncpa [#allocation3], 1
    %550 = vsyncpa [#allocation6], 1
    %551 = vsyncpa [#allocation9], 1
    %552 = vsyncpa [#allocation4], 1

</llo_original>
